<compile_context>
chip_gen: v7x
topology: tpu7x:2x2x1
jax: 0.10.0
libtpu: 0.0.40
codegen_flags: <defaults>
</compile_context>

<pallas_src>
import math
import numpy as np
import jax
import jax.numpy as jnp
from jax import lax
from jax.experimental import pallas as pl
from jax.experimental.pallas import tpu as pltpu

# ---- module hyper-parameters (small, consistent with StarTileDecoder) ----
TILE_SLEN = 4
PTILE_SLEN = 8
PSF_SLEN = 11
N_BANDS = 2
N_PTILES = 8
MAX_SOURCES = 3

# odd stamp size produced by Tiler.fit_source_to_ptile (expand or trim target)
STAMP = PTILE_SLEN + (1 if PTILE_SLEN % 2 == 0 else 0)

if PTILE_SLEN >= PSF_SLEN:
    # expand: stamp = zero-padded psf; sampling the raw psf with shifted coordinates
    # is exact (out-of-psf stamp pixels are automatically zero).
    COORD_SHIFT = -int((STAMP - PSF_SLEN) / 2)
    NEEDS_MASK = False
    L_IDX, U_IDX = 0, PSF_SLEN
else:
    # trim: stamp = psf[L:U, L:U]; equivalent to sampling the full psf with coords
    # shifted by +L and the psf zeroed outside the central window.
    _center = (PSF_SLEN - 1) / 2
    _r = math.floor(STAMP / 2)
    L_IDX = int(_center - _r)
    U_IDX = int(_center + _r + 1)
    COORD_SHIFT = L_IDX
    NEEDS_MASK = True


# --------------------------------------------------------------------------
# plain-numpy glue (buffers computed exactly like the PyTorch module)
# --------------------------------------------------------------------------
def get_mgrid(slen):
    offset = (slen - 1) / 2
    x, y = np.mgrid[-offset:offset + 1, -offset:offset + 1]
    mgrid = np.dstack((y, x)) / offset
    return (mgrid * (slen - 1) / slen).astype(np.float32)


def cached_radii_grid(psf_slen):
    grid = get_mgrid(psf_slen).astype(np.float64) * (psf_slen - 1) / 2
    grid = grid * psf_slen / (psf_slen - 1)
    return np.sqrt((grid ** 2).sum(2)).astype(np.float32)


# --------------------------------------------------------------------------
# fused Pallas kernel: PSF synthesis + Tiler (grid_sample of flux-scaled PSF,
# summed over sources) for ALL ptiles / sources / bands in one invocation.
# --------------------------------------------------------------------------
def star_decoder_kernel(params_ref, radii_ref, iy_ref, ix_ref, flux_ref,
                        sbool_ref, sel0_ref, sel1_ref, out_ref):
    """params_ref: SMEM (NB, 6) log PSF params.
    radii_ref: VMEM (PSF_SLEN, PSF_SLEN) radial distance grid.
    iy_ref: (1, M) y sample coords (full-psf pixel space), M = NP*MS*P, lane m=(p,n,i).
    ix_ref: (P, M) x sample coords (row = output col j, value independent of i).
    flux_ref: (NB, M) fluxes broadcast along i;  sbool_ref: (1, M) star_bools.
    sel0/1_ref: (M, C) constant 0/1 source-sum + band-pack matrices, C = NP*NB*P.
    out_ref: (P, C) lane-dense output slab out[j, (p*NB + b)*P + i]."""
    nb = N_BANDS
    s = PSF_SLEN
    m = iy_ref.shape[1]
    p_out = ix_ref.shape[0]

    # ---- PSF synthesis (per band, sum-normalised over the FULL psf support) ----
    r2 = radii_ref[...] * radii_ref[...]
    if NEEDS_MASK:
        rr = lax.broadcasted_iota(jnp.int32, (s, s), 0)
        cc = lax.broadcasted_iota(jnp.int32, (s, s), 1)
        window = ((rr >= L_IDX) & (rr < U_IDX)
                  & (cc >= L_IDX) & (cc < U_IDX)).astype(jnp.float32)

    psf = []
    for b in range(nb):
        sigma1 = jnp.exp(params_ref[b, 0])
        sigma2 = jnp.exp(params_ref[b, 1])
        sigmap = jnp.exp(params_ref[b, 2])
        beta = jnp.exp(params_ref[b, 3])
        bcoef = jnp.exp(params_ref[b, 4])
        p0 = jnp.exp(params_ref[b, 5])
        term1 = jnp.exp(-r2 / (2.0 * sigma1))
        term2 = bcoef * jnp.exp(-r2 / (2.0 * sigma2))
        # (1 + r^2/(beta*sigmap)) ** (-beta/2) via exp/log (EUP)
        term3 = p0 * jnp.exp(-0.5 * beta * jnp.log(1.0 + r2 / (beta * sigmap)))
        raw = (term1 + term2 + term3) / (1.0 + bcoef + p0)
        norm = raw * (1.0 / jnp.sum(raw))      # normalise over full 11x11 (as PyTorch)
        psf.append(norm * window if NEEDS_MASK else norm)

    # ---- lane-packed one-hot y-interpolation weights: A[k, m], one compare pass ----
    iy = jnp.broadcast_to(iy_ref[...], (s, m))
    k_row = lax.broadcasted_iota(jnp.int32, (s, m), 0)
    iy0f = jnp.floor(iy)
    wy1 = iy - iy0f
    wy0 = 1.0 - wy1
    iy0 = iy0f.astype(jnp.int32)
    a_mat = ((k_row == iy0).astype(jnp.float32) * wy0
             + (k_row == iy0 + 1).astype(jnp.float32) * wy1)          # (S, M)

    # ---- stage 1 (MXU, one matmul per band): row-interp for all (p, n, i) at once
    #      T_b[l, m] = sum_k psf_b[k, l] * A[k, m]
    t_rows = [lax.dot_general(psf[b], a_mat, (((0,), (0,)), ((), ())),
                              preferred_element_type=jnp.float32) for b in range(nb)]

    # ---- stage 2 (VPU): column interpolation accumulated over the S psf columns ----
    ix = ix_ref[...]                           # (P, M)
    ix0f = jnp.floor(ix)
    wx1 = ix - ix0f
    wx0 = 1.0 - wx1
    ix0 = ix0f.astype(jnp.int32)
    scale = flux_ref[...] * sbool_ref[...]     # (NB, M) = flux * star_bool

    acc = [jnp.zeros((p_out, m), jnp.float32) for _ in range(nb)]
    for l in range(s):
        w_l = (jnp.where(ix0 == l, wx0, 0.0)
               + jnp.where(ix0 == l - 1, wx1, 0.0))                    # (P, M)
        for b in range(nb):
            acc[b] = acc[b] + w_l * t_rows[b][l:l + 1, :]
    for b in range(nb):
        acc[b] = acc[b] * scale[b:b + 1, :]

    # ---- finish (MXU): constant 0/1 matmuls sum over sources and pack the
    #      lane-dense (P, NP*NB*P) output slab -> one set of unmasked stores ----
    slab = jnp.dot(acc[0], sel0_ref[...], preferred_element_type=jnp.float32)
    slab = slab + jnp.dot(acc[1], sel1_ref[...], preferred_element_type=jnp.float32)
    out_ref[...] = slab


def star_tile_decoder_forward(locs, fluxes, star_bools, params, radii):
    """StarTileDecoder.forward: locs (NP, MS, 2), fluxes (NP, MS, NB),
    star_bools (NP, MS, 1) -> (NP, NB, PTILE_SLEN, PTILE_SLEN)."""
    n_ptiles, max_sources = locs.shape[0], locs.shape[1]
    p = PTILE_SLEN
    m = n_ptiles * max_sources * p            # lane axis for (ptile, source, pixel)
    c = n_ptiles * N_BANDS * p                # output slab lane axis

    # grid_sample (align_corners=True) pixel-space coordinates in the FULL psf frame
    cg = get_mgrid(p)                         # (P, P, 2) cached_grid
    gx_base = jnp.asarray(cg[0, :, 0])        # x coord, varies along width j
    gy_base = jnp.asarray(cg[:, 0, 1])        # y coord, varies along height i
    padding = (p - TILE_SLEN) / 2
    lt = locs * (TILE_SLEN / p) + padding / p
    lt = (lt - 0.5) * 2.0
    iy = (gy_base[None, None, :] - lt[..., 0:1] + 1.0) * 0.5 * (STAMP - 1) + COORD_SHIFT
    ix = (gx_base[None, None, :] - lt[..., 1:2] + 1.0) * 0.5 * (STAMP - 1) + COORD_SHIFT

    # lane-packed input layouts (pure plumbing): lane index m = (p*MS + n)*P + i
    iy_flat = iy.reshape(1, m).astype(jnp.float32)
    ix_rep = jnp.broadcast_to(
        jnp.transpose(ix, (2, 0, 1))[:, :, :, None],
        (p, n_ptiles, max_sources, p)).reshape(p, m).astype(jnp.float32)
    flux_rep = jnp.broadcast_to(
        jnp.transpose(fluxes, (2, 0, 1))[:, :, :, None],
        (N_BANDS, n_ptiles, max_sources, p)).reshape(N_BANDS, m).astype(jnp.float32)
    bool_rep = jnp.broadcast_to(
        star_bools, (n_ptiles, max_sources, p)).reshape(1, m).astype(jnp.float32)

    # constant 0/1 selection matrices: sum over sources + pack (p, b, i) lanes
    sel = np.zeros((N_BANDS, m, c), dtype=np.float32)
    p_idx = np.arange(n_ptiles)[:, None, None]
    n_idx = np.arange(max_sources)[None, :, None]
    i_idx = np.arange(p)[None, None, :]
    rows = (p_idx * max_sources + n_idx) * p + i_idx                 # (NP, MS, P)
    for b in range(N_BANDS):
        cols = (p_idx * N_BANDS + b) * p + i_idx                     # (NP, 1, P)
        sel[b, rows, np.broadcast_to(cols, rows.shape)] = 1.0
    sel0 = jnp.asarray(sel[0])
    sel1 = jnp.asarray(sel[1])

    slab = pl.pallas_call(
        star_decoder_kernel,
        out_shape=jax.ShapeDtypeStruct((p, c), jnp.float32),
        in_specs=[
            pl.BlockSpec(memory_space=pltpu.MemorySpace.SMEM),   # psf log-params
            pl.BlockSpec(memory_space=pltpu.MemorySpace.VMEM),   # radii grid
            pl.BlockSpec(memory_space=pltpu.MemorySpace.VMEM),   # iy_flat
            pl.BlockSpec(memory_space=pltpu.MemorySpace.VMEM),   # ix_rep
            pl.BlockSpec(memory_space=pltpu.MemorySpace.VMEM),   # flux_rep
            pl.BlockSpec(memory_space=pltpu.MemorySpace.VMEM),   # bool_rep
            pl.BlockSpec(memory_space=pltpu.MemorySpace.VMEM),   # sel0
            pl.BlockSpec(memory_space=pltpu.MemorySpace.VMEM),   # sel1
        ],
        out_specs=pl.BlockSpec(memory_space=pltpu.MemorySpace.VMEM),
    )(params, radii, iy_flat, ix_rep, flux_rep, bool_rep, sel0, sel1)

    # slab[j, (p*NB + b)*P + i]  ->  NCHW (n_ptiles, n_bands, P, P)
    out = slab.reshape(p, n_ptiles, N_BANDS, p)
    return jnp.transpose(out, (1, 2, 3, 0))


# --------------------------------------------------------------------------
# pure numpy reference (mirrors the PyTorch forward, incl. F.grid_sample)
# --------------------------------------------------------------------------
def _grid_sample_np(src, grid):
    """F.grid_sample, bilinear, padding_mode='zeros', align_corners=True."""
    n, c, h, w = src.shape
    gx, gy = grid[..., 0], grid[..., 1]
    ix = (gx + 1) * 0.5 * (w - 1)
    iy = (gy + 1) * 0.5 * (h - 1)
    ix0 = np.floor(ix).astype(np.int64)
    iy0 = np.floor(iy).astype(np.int64)
    out = np.zeros((n, c) + gx.shape[1:], dtype=np.float64)
    corners = [(iy0, ix0, (iy0 + 1 - iy) * (ix0 + 1 - ix)),
               (iy0, ix0 + 1, (iy0 + 1 - iy) * (ix - ix0)),
               (iy0 + 1, ix0, (iy - iy0) * (ix0 + 1 - ix)),
               (iy0 + 1, ix0 + 1, (iy - iy0) * (ix - ix0))]
    for yi, xi, wgt in corners:
        valid = (yi >= 0) & (yi < h) & (xi >= 0) & (xi < w)
        yc = np.clip(yi, 0, h - 1)
        xc = np.clip(xi, 0, w - 1)
        for b in range(n):
            vals = src[b][:, yc[b], xc[b]]               # (c, Ho, Wo)
            out[b] += vals * (wgt[b] * valid[b])[None]
    return out


def reference_forward(locs, fluxes, star_bools, params, radii):
    pexp = np.exp(params.astype(np.float64))
    r2 = radii.astype(np.float64) ** 2
    psf_list = []
    for b in range(N_BANDS):
        s1, s2, sp, beta, bb, p0 = pexp[b]
        t1 = np.exp(-r2 / (2 * s1))
        t2 = bb * np.exp(-r2 / (2 * s2))
        t3 = p0 * (1 + r2 / (beta * sp)) ** (-beta / 2)
        raw = (t1 + t2 + t3) / (1 + bb + p0)
        psf_list.append(raw * (1.0 / raw.sum()))
    psf = np.stack(psf_list)
    if PTILE_SLEN >= PSF_SLEN:
        off = int((STAMP - PSF_SLEN) / 2)
        psf_fit = np.zeros((N_BANDS, STAMP, STAMP))
        psf_fit[:, off:off + PSF_SLEN, off:off + PSF_SLEN] = psf
    else:
        psf_fit = psf[:, L_IDX:U_IDX, L_IDX:U_IDX]
    sources = (psf_fit[None, None] * fluxes[..., None, None]
               * star_bools[:, :, :, None, None])
    cg = get_mgrid(PTILE_SLEN).astype(np.float64)
    out = np.zeros((locs.shape[0], N_BANDS, PTILE_SLEN, PTILE_SLEN))
    padding = (PTILE_SLEN - TILE_SLEN) / 2
    for n in range(locs.shape[1]):
        lt = locs[:, n, :] * (TILE_SLEN / PTILE_SLEN) + padding / PTILE_SLEN
        lt = (lt - 0.5) * 2.0
        lsw = lt[:, [1, 0]]
        grid_loc = cg[None] - lsw[:, None, None, :]
        out += _grid_sample_np(sources[:, n], grid_loc)
    return out.astype(np.float32)


# --------------------------------------------------------------------------
if __name__ == "__main__":
    key = jax.random.PRNGKey(0)
    k1, k2, k3 = jax.random.split(key, 3)
    locs = jax.random.uniform(k1, (N_PTILES, MAX_SOURCES, 2), dtype=jnp.float32)
    fluxes = jax.random.uniform(k2, (N_PTILES, MAX_SOURCES, N_BANDS),
                                dtype=jnp.float32, minval=0.5, maxval=3.0)
    star_bools = (jax.random.uniform(k3, (N_PTILES, MAX_SOURCES, 1)) > 0.3
                  ).astype(jnp.float32)

    # deterministic log-PSF params: [log sigma1, sigma2, sigmap, beta, b, p0]
    base = np.log(np.array([1.2, 4.5, 5.0, 3.0, 0.12, 0.08], dtype=np.float32))
    params = np.stack([base + 0.05 * b for b in range(N_BANDS)]).astype(np.float32)
    radii = cached_radii_grid(PSF_SLEN)

    out = star_tile_decoder_forward(locs, fluxes, star_bools,
                                    jnp.asarray(params), jnp.asarray(radii))
    out = jax.block_until_ready(out)

    ref = reference_forward(np.asarray(locs), np.asarray(fluxes),
                            np.asarray(star_bools), params, radii)
    assert out.shape == (N_PTILES, N_BANDS, PTILE_SLEN, PTILE_SLEN)
    np.testing.assert_allclose(np.asarray(out), ref, rtol=1e-3, atol=1e-5)
    print("KERNEL_OK")
</pallas_src>

<mosaic_0001>
module attributes {stable_mosaic.version = 11 : i64} {
  func.func @star_decoder_kernel(%arg0: memref<2x6xf32, #tpu.memory_space<smem>>, %arg1: memref<11x11xf32, #tpu.memory_space<vmem>>, %arg2: memref<1x192xf32, #tpu.memory_space<vmem>>, %arg3: memref<8x192xf32, #tpu.memory_space<vmem>>, %arg4: memref<2x192xf32, #tpu.memory_space<vmem>>, %arg5: memref<1x192xf32, #tpu.memory_space<vmem>>, %arg6: memref<192x128xf32, #tpu.memory_space<vmem>>, %arg7: memref<192x128xf32, #tpu.memory_space<vmem>>, %arg8: memref<8x128xf32, #tpu.memory_space<vmem>>) attributes {dimension_semantics = [], scalar_prefetch = 0 : i64, scratch_operands = 0 : i64, tpu.core_type = #tpu.core_type<tc>} {
    %c0 = arith.constant 0 : index
    %c0_0 = arith.constant 0 : index
    %0 = vector.load %arg1[%c0, %c0_0] : memref<11x11xf32, #tpu.memory_space<vmem>>, vector<11x11xf32>
    %c0_1 = arith.constant 0 : index
    %c0_2 = arith.constant 0 : index
    %1 = vector.load %arg1[%c0_1, %c0_2] : memref<11x11xf32, #tpu.memory_space<vmem>>, vector<11x11xf32>
    %2 = arith.mulf %0, %1 : vector<11x11xf32>
    %3 = tpu.iota {dimensions = array<i32: 0>} : vector<11x11xi32>
    %4 = tpu.iota {dimensions = array<i32: 1>} : vector<11x11xi32>
    %c1_i32 = arith.constant 1 : i32
    %5 = vector.broadcast %c1_i32 : i32 to vector<11x11xi32>
    %6 = arith.cmpi sge, %3, %5 : vector<11x11xi32>
    %c10_i32 = arith.constant 10 : i32
    %7 = vector.broadcast %c10_i32 : i32 to vector<11x11xi32>
    %8 = arith.cmpi slt, %3, %7 : vector<11x11xi32>
    %9 = arith.andi %6, %8 : vector<11x11xi1>
    %c1_i32_3 = arith.constant 1 : i32
    %10 = vector.broadcast %c1_i32_3 : i32 to vector<11x11xi32>
    %11 = arith.cmpi sge, %4, %10 : vector<11x11xi32>
    %12 = arith.andi %9, %11 : vector<11x11xi1>
    %c10_i32_4 = arith.constant 10 : i32
    %13 = vector.broadcast %c10_i32_4 : i32 to vector<11x11xi32>
    %14 = arith.cmpi slt, %4, %13 : vector<11x11xi32>
    %15 = arith.andi %12, %14 : vector<11x11xi1>
    %16 = arith.extui %15 : vector<11x11xi1> to vector<11x11xi32>
    %17 = arith.sitofp %16 : vector<11x11xi32> to vector<11x11xf32>
    %c0_5 = arith.constant 0 : index
    %c0_6 = arith.constant 0 : index
    %18 = memref.load %arg0[%c0_5, %c0_6] : memref<2x6xf32, #tpu.memory_space<smem>>
    %19 = math.exp %18 : f32
    %c0_7 = arith.constant 0 : index
    %c1 = arith.constant 1 : index
    %20 = memref.load %arg0[%c0_7, %c1] : memref<2x6xf32, #tpu.memory_space<smem>>
    %21 = math.exp %20 : f32
    %c0_8 = arith.constant 0 : index
    %c2 = arith.constant 2 : index
    %22 = memref.load %arg0[%c0_8, %c2] : memref<2x6xf32, #tpu.memory_space<smem>>
    %23 = math.exp %22 : f32
    %c0_9 = arith.constant 0 : index
    %c3 = arith.constant 3 : index
    %24 = memref.load %arg0[%c0_9, %c3] : memref<2x6xf32, #tpu.memory_space<smem>>
    %25 = math.exp %24 : f32
    %c0_10 = arith.constant 0 : index
    %c4 = arith.constant 4 : index
    %26 = memref.load %arg0[%c0_10, %c4] : memref<2x6xf32, #tpu.memory_space<smem>>
    %27 = math.exp %26 : f32
    %c0_11 = arith.constant 0 : index
    %c5 = arith.constant 5 : index
    %28 = memref.load %arg0[%c0_11, %c5] : memref<2x6xf32, #tpu.memory_space<smem>>
    %29 = math.exp %28 : f32
    %cst = arith.constant 0.000000e+00 : f32
    %30 = vector.broadcast %cst : f32 to vector<11x11xf32>
    %31 = arith.subf %30, %2 : vector<11x11xf32>
    %cst_12 = arith.constant 2.000000e+00 : f32
    %32 = arith.mulf %cst_12, %19 : f32
    %33 = vector.broadcast %32 : f32 to vector<11x11xf32>
    %34 = arith.divf %31, %33 : vector<11x11xf32>
    %35 = math.exp %34 : vector<11x11xf32>
    %cst_13 = arith.constant 0.000000e+00 : f32
    %36 = vector.broadcast %cst_13 : f32 to vector<11x11xf32>
    %37 = arith.subf %36, %2 : vector<11x11xf32>
    %cst_14 = arith.constant 2.000000e+00 : f32
    %38 = arith.mulf %cst_14, %21 : f32
    %39 = vector.broadcast %38 : f32 to vector<11x11xf32>
    %40 = arith.divf %37, %39 : vector<11x11xf32>
    %41 = math.exp %40 : vector<11x11xf32>
    %42 = vector.broadcast %27 : f32 to vector<11x11xf32>
    %43 = arith.mulf %42, %41 : vector<11x11xf32>
    %cst_15 = arith.constant -5.000000e-01 : f32
    %44 = arith.mulf %cst_15, %25 : f32
    %45 = arith.mulf %25, %23 : f32
    %46 = vector.broadcast %45 : f32 to vector<11x11xf32>
    %47 = arith.divf %2, %46 : vector<11x11xf32>
    %cst_16 = arith.constant 1.000000e+00 : f32
    %48 = vector.broadcast %cst_16 : f32 to vector<11x11xf32>
    %49 = arith.addf %48, %47 : vector<11x11xf32>
    %50 = math.log %49 : vector<11x11xf32>
    %51 = vector.broadcast %44 : f32 to vector<11x11xf32>
    %52 = arith.mulf %51, %50 : vector<11x11xf32>
    %53 = math.exp %52 : vector<11x11xf32>
    %54 = vector.broadcast %29 : f32 to vector<11x11xf32>
    %55 = arith.mulf %54, %53 : vector<11x11xf32>
    %56 = arith.addf %35, %43 : vector<11x11xf32>
    %57 = arith.addf %56, %55 : vector<11x11xf32>
    %cst_17 = arith.constant 1.000000e+00 : f32
    %58 = arith.addf %cst_17, %27 : f32
    %59 = arith.addf %58, %29 : f32
    %60 = vector.broadcast %59 : f32 to vector<11x11xf32>
    %61 = arith.divf %57, %60 : vector<11x11xf32>
    %62 = vector.shape_cast %61 : vector<11x11xf32> to vector<1x11x11xf32>
    %cst_18 = arith.constant dense<0.000000e+00> : vector<1xf32>
    %63 = vector.multi_reduction <add>, %62, %cst_18 [1, 2] : vector<1x11x11xf32> to vector<1xf32>
    %64 = vector.shape_cast %63 : vector<1xf32> to vector<1x1x1xf32>
    %65 = vector.extract %64[0, 0, 0] : f32 from vector<1x1x1xf32>
    %cst_19 = arith.constant 1.000000e+00 : f32
    %66 = arith.divf %cst_19, %65 : f32
    %67 = vector.broadcast %66 : f32 to vector<11x11xf32>
    %68 = arith.mulf %61, %67 : vector<11x11xf32>
    %69 = arith.mulf %68, %17 : vector<11x11xf32>
    %c1_20 = arith.constant 1 : index
    %c0_21 = arith.constant 0 : index
    %70 = memref.load %arg0[%c1_20, %c0_21] : memref<2x6xf32, #tpu.memory_space<smem>>
    %71 = math.exp %70 : f32
    %c1_22 = arith.constant 1 : index
    %c1_23 = arith.constant 1 : index
    %72 = memref.load %arg0[%c1_22, %c1_23] : memref<2x6xf32, #tpu.memory_space<smem>>
    %73 = math.exp %72 : f32
    %c1_24 = arith.constant 1 : index
    %c2_25 = arith.constant 2 : index
    %74 = memref.load %arg0[%c1_24, %c2_25] : memref<2x6xf32, #tpu.memory_space<smem>>
    %75 = math.exp %74 : f32
    %c1_26 = arith.constant 1 : index
    %c3_27 = arith.constant 3 : index
    %76 = memref.load %arg0[%c1_26, %c3_27] : memref<2x6xf32, #tpu.memory_space<smem>>
    %77 = math.exp %76 : f32
    %c1_28 = arith.constant 1 : index
    %c4_29 = arith.constant 4 : index
    %78 = memref.load %arg0[%c1_28, %c4_29] : memref<2x6xf32, #tpu.memory_space<smem>>
    %79 = math.exp %78 : f32
    %c1_30 = arith.constant 1 : index
    %c5_31 = arith.constant 5 : index
    %80 = memref.load %arg0[%c1_30, %c5_31] : memref<2x6xf32, #tpu.memory_space<smem>>
    %81 = math.exp %80 : f32
    %cst_32 = arith.constant 0.000000e+00 : f32
    %82 = vector.broadcast %cst_32 : f32 to vector<11x11xf32>
    %83 = arith.subf %82, %2 : vector<11x11xf32>
    %cst_33 = arith.constant 2.000000e+00 : f32
    %84 = arith.mulf %cst_33, %71 : f32
    %85 = vector.broadcast %84 : f32 to vector<11x11xf32>
    %86 = arith.divf %83, %85 : vector<11x11xf32>
    %87 = math.exp %86 : vector<11x11xf32>
    %cst_34 = arith.constant 0.000000e+00 : f32
    %88 = vector.broadcast %cst_34 : f32 to vector<11x11xf32>
    %89 = arith.subf %88, %2 : vector<11x11xf32>
    %cst_35 = arith.constant 2.000000e+00 : f32
    %90 = arith.mulf %cst_35, %73 : f32
    %91 = vector.broadcast %90 : f32 to vector<11x11xf32>
    %92 = arith.divf %89, %91 : vector<11x11xf32>
    %93 = math.exp %92 : vector<11x11xf32>
    %94 = vector.broadcast %79 : f32 to vector<11x11xf32>
    %95 = arith.mulf %94, %93 : vector<11x11xf32>
    %cst_36 = arith.constant -5.000000e-01 : f32
    %96 = arith.mulf %cst_36, %77 : f32
    %97 = arith.mulf %77, %75 : f32
    %98 = vector.broadcast %97 : f32 to vector<11x11xf32>
    %99 = arith.divf %2, %98 : vector<11x11xf32>
    %cst_37 = arith.constant 1.000000e+00 : f32
    %100 = vector.broadcast %cst_37 : f32 to vector<11x11xf32>
    %101 = arith.addf %100, %99 : vector<11x11xf32>
    %102 = math.log %101 : vector<11x11xf32>
    %103 = vector.broadcast %96 : f32 to vector<11x11xf32>
    %104 = arith.mulf %103, %102 : vector<11x11xf32>
    %105 = math.exp %104 : vector<11x11xf32>
    %106 = vector.broadcast %81 : f32 to vector<11x11xf32>
    %107 = arith.mulf %106, %105 : vector<11x11xf32>
    %108 = arith.addf %87, %95 : vector<11x11xf32>
    %109 = arith.addf %108, %107 : vector<11x11xf32>
    %cst_38 = arith.constant 1.000000e+00 : f32
    %110 = arith.addf %cst_38, %79 : f32
    %111 = arith.addf %110, %81 : f32
    %112 = vector.broadcast %111 : f32 to vector<11x11xf32>
    %113 = arith.divf %109, %112 : vector<11x11xf32>
    %114 = vector.shape_cast %113 : vector<11x11xf32> to vector<1x11x11xf32>
    %cst_39 = arith.constant dense<0.000000e+00> : vector<1xf32>
    %115 = vector.multi_reduction <add>, %114, %cst_39 [1, 2] : vector<1x11x11xf32> to vector<1xf32>
    %116 = vector.shape_cast %115 : vector<1xf32> to vector<1x1x1xf32>
    %117 = vector.extract %116[0, 0, 0] : f32 from vector<1x1x1xf32>
    %cst_40 = arith.constant 1.000000e+00 : f32
    %118 = arith.divf %cst_40, %117 : f32
    %119 = vector.broadcast %118 : f32 to vector<11x11xf32>
    %120 = arith.mulf %113, %119 : vector<11x11xf32>
    %121 = arith.mulf %120, %17 : vector<11x11xf32>
    %c0_41 = arith.constant 0 : index
    %c0_42 = arith.constant 0 : index
    %122 = vector.load %arg2[%c0_41, %c0_42] : memref<1x192xf32, #tpu.memory_space<vmem>>, vector<1x192xf32>
    %123 = vector.shape_cast %122 : vector<1x192xf32> to vector<1x192xf32>
    %124 = vector.broadcast %123 : vector<1x192xf32> to vector<11x192xf32>
    %125 = tpu.iota {dimensions = array<i32: 0>} : vector<11x192xi32>
    %126 = math.floor %124 : vector<11x192xf32>
    %127 = arith.subf %124, %126 : vector<11x192xf32>
    %cst_43 = arith.constant 1.000000e+00 : f32
    %128 = vector.broadcast %cst_43 : f32 to vector<11x192xf32>
    %129 = arith.subf %128, %127 : vector<11x192xf32>
    %130 = arith.fptosi %126 : vector<11x192xf32> to vector<11x192xi32>
    %131 = arith.cmpi eq, %125, %130 : vector<11x192xi32>
    %132 = arith.extui %131 : vector<11x192xi1> to vector<11x192xi32>
    %133 = arith.sitofp %132 : vector<11x192xi32> to vector<11x192xf32>
    %134 = arith.mulf %133, %129 : vector<11x192xf32>
    %c1_i32_44 = arith.constant 1 : i32
    %135 = vector.broadcast %c1_i32_44 : i32 to vector<11x192xi32>
    %136 = arith.addi %130, %135 : vector<11x192xi32>
    %137 = arith.cmpi eq, %125, %136 : vector<11x192xi32>
    %138 = arith.extui %137 : vector<11x192xi1> to vector<11x192xi32>
    %139 = arith.sitofp %138 : vector<11x192xi32> to vector<11x192xf32>
    %140 = arith.mulf %139, %127 : vector<11x192xf32>
    %141 = arith.addf %134, %140 : vector<11x192xf32>
    %cst_45 = arith.constant dense<0.000000e+00> : vector<11x192xf32>
    %142 = tpu.matmul %69, %141, %cst_45 {dimension_numbers = #tpu.dot_dimension_numbers<[0], [0], [1], [1], [0, 1, 1, 1], [], []>} : vector<11x11xf32>, vector<11x192xf32>, vector<11x192xf32> -> vector<11x192xf32>
    %cst_46 = arith.constant dense<0.000000e+00> : vector<11x192xf32>
    %143 = tpu.matmul %121, %141, %cst_46 {dimension_numbers = #tpu.dot_dimension_numbers<[0], [0], [1], [1], [0, 1, 1, 1], [], []>} : vector<11x11xf32>, vector<11x192xf32>, vector<11x192xf32> -> vector<11x192xf32>
    %c0_47 = arith.constant 0 : index
    %c0_48 = arith.constant 0 : index
    %144 = vector.load %arg3[%c0_47, %c0_48] : memref<8x192xf32, #tpu.memory_space<vmem>>, vector<8x192xf32>
    %145 = math.floor %144 : vector<8x192xf32>
    %146 = arith.subf %144, %145 : vector<8x192xf32>
    %cst_49 = arith.constant 1.000000e+00 : f32
    %147 = vector.broadcast %cst_49 : f32 to vector<8x192xf32>
    %148 = arith.subf %147, %146 : vector<8x192xf32>
    %149 = arith.fptosi %145 : vector<8x192xf32> to vector<8x192xi32>
    %c0_50 = arith.constant 0 : index
    %c0_51 = arith.constant 0 : index
    %150 = vector.load %arg4[%c0_50, %c0_51] : memref<2x192xf32, #tpu.memory_space<vmem>>, vector<2x192xf32>
    %c0_52 = arith.constant 0 : index
    %c0_53 = arith.constant 0 : index
    %151 = vector.load %arg5[%c0_52, %c0_53] : memref<1x192xf32, #tpu.memory_space<vmem>>, vector<1x192xf32>
    %152 = vector.broadcast %151 : vector<1x192xf32> to vector<2x192xf32>
    %153 = arith.mulf %150, %152 : vector<2x192xf32>
    %cst_54 = arith.constant 0.000000e+00 : f32
    %154 = vector.broadcast %cst_54 : f32 to vector<8x192xf32>
    %cst_55 = arith.constant 0.000000e+00 : f32
    %155 = vector.broadcast %cst_55 : f32 to vector<8x192xf32>
    %c0_i32 = arith.constant 0 : i32
    %156 = vector.broadcast %c0_i32 : i32 to vector<8x192xi32>
    %157 = arith.cmpi eq, %149, %156 : vector<8x192xi32>
    %cst_56 = arith.constant 0.000000e+00 : f32
    %158 = vector.broadcast %cst_56 : f32 to vector<8x192xf32>
    %159 = arith.select %157, %148, %158 : vector<8x192xi1>, vector<8x192xf32>
    %c-1_i32 = arith.constant -1 : i32
    %160 = vector.broadcast %c-1_i32 : i32 to vector<8x192xi32>
    %161 = arith.cmpi eq, %149, %160 : vector<8x192xi32>
    %cst_57 = arith.constant 0.000000e+00 : f32
    %162 = vector.broadcast %cst_57 : f32 to vector<8x192xf32>
    %163 = arith.select %161, %146, %162 : vector<8x192xi1>, vector<8x192xf32>
    %164 = arith.addf %159, %163 : vector<8x192xf32>
    %165 = vector.extract_strided_slice %142 {offsets = [0, 0], sizes = [1, 192], strides = [1, 1]} : vector<11x192xf32> to vector<1x192xf32>
    %166 = vector.broadcast %165 : vector<1x192xf32> to vector<8x192xf32>
    %167 = arith.mulf %164, %166 : vector<8x192xf32>
    %168 = arith.addf %154, %167 : vector<8x192xf32>
    %169 = vector.extract_strided_slice %143 {offsets = [0, 0], sizes = [1, 192], strides = [1, 1]} : vector<11x192xf32> to vector<1x192xf32>
    %170 = vector.broadcast %169 : vector<1x192xf32> to vector<8x192xf32>
    %171 = arith.mulf %164, %170 : vector<8x192xf32>
    %172 = arith.addf %155, %171 : vector<8x192xf32>
    %c1_i32_58 = arith.constant 1 : i32
    %173 = vector.broadcast %c1_i32_58 : i32 to vector<8x192xi32>
    %174 = arith.cmpi eq, %149, %173 : vector<8x192xi32>
    %cst_59 = arith.constant 0.000000e+00 : f32
    %175 = vector.broadcast %cst_59 : f32 to vector<8x192xf32>
    %176 = arith.select %174, %148, %175 : vector<8x192xi1>, vector<8x192xf32>
    %c0_i32_60 = arith.constant 0 : i32
    %177 = vector.broadcast %c0_i32_60 : i32 to vector<8x192xi32>
    %178 = arith.cmpi eq, %149, %177 : vector<8x192xi32>
    %cst_61 = arith.constant 0.000000e+00 : f32
    %179 = vector.broadcast %cst_61 : f32 to vector<8x192xf32>
    %180 = arith.select %178, %146, %179 : vector<8x192xi1>, vector<8x192xf32>
    %181 = arith.addf %176, %180 : vector<8x192xf32>
    %182 = vector.extract_strided_slice %142 {offsets = [1, 0], sizes = [1, 192], strides = [1, 1]} : vector<11x192xf32> to vector<1x192xf32>
    %183 = vector.broadcast %182 : vector<1x192xf32> to vector<8x192xf32>
    %184 = arith.mulf %181, %183 : vector<8x192xf32>
    %185 = arith.addf %168, %184 : vector<8x192xf32>
    %186 = vector.extract_strided_slice %143 {offsets = [1, 0], sizes = [1, 192], strides = [1, 1]} : vector<11x192xf32> to vector<1x192xf32>
    %187 = vector.broadcast %186 : vector<1x192xf32> to vector<8x192xf32>
    %188 = arith.mulf %181, %187 : vector<8x192xf32>
    %189 = arith.addf %172, %188 : vector<8x192xf32>
    %c2_i32 = arith.constant 2 : i32
    %190 = vector.broadcast %c2_i32 : i32 to vector<8x192xi32>
    %191 = arith.cmpi eq, %149, %190 : vector<8x192xi32>
    %cst_62 = arith.constant 0.000000e+00 : f32
    %192 = vector.broadcast %cst_62 : f32 to vector<8x192xf32>
    %193 = arith.select %191, %148, %192 : vector<8x192xi1>, vector<8x192xf32>
    %c1_i32_63 = arith.constant 1 : i32
    %194 = vector.broadcast %c1_i32_63 : i32 to vector<8x192xi32>
    %195 = arith.cmpi eq, %149, %194 : vector<8x192xi32>
    %cst_64 = arith.constant 0.000000e+00 : f32
    %196 = vector.broadcast %cst_64 : f32 to vector<8x192xf32>
    %197 = arith.select %195, %146, %196 : vector<8x192xi1>, vector<8x192xf32>
    %198 = arith.addf %193, %197 : vector<8x192xf32>
    %199 = vector.extract_strided_slice %142 {offsets = [2, 0], sizes = [1, 192], strides = [1, 1]} : vector<11x192xf32> to vector<1x192xf32>
    %200 = vector.broadcast %199 : vector<1x192xf32> to vector<8x192xf32>
    %201 = arith.mulf %198, %200 : vector<8x192xf32>
    %202 = arith.addf %185, %201 : vector<8x192xf32>
    %203 = vector.extract_strided_slice %143 {offsets = [2, 0], sizes = [1, 192], strides = [1, 1]} : vector<11x192xf32> to vector<1x192xf32>
    %204 = vector.broadcast %203 : vector<1x192xf32> to vector<8x192xf32>
    %205 = arith.mulf %198, %204 : vector<8x192xf32>
    %206 = arith.addf %189, %205 : vector<8x192xf32>
    %c3_i32 = arith.constant 3 : i32
    %207 = vector.broadcast %c3_i32 : i32 to vector<8x192xi32>
    %208 = arith.cmpi eq, %149, %207 : vector<8x192xi32>
    %cst_65 = arith.constant 0.000000e+00 : f32
    %209 = vector.broadcast %cst_65 : f32 to vector<8x192xf32>
    %210 = arith.select %208, %148, %209 : vector<8x192xi1>, vector<8x192xf32>
    %c2_i32_66 = arith.constant 2 : i32
    %211 = vector.broadcast %c2_i32_66 : i32 to vector<8x192xi32>
    %212 = arith.cmpi eq, %149, %211 : vector<8x192xi32>
    %cst_67 = arith.constant 0.000000e+00 : f32
    %213 = vector.broadcast %cst_67 : f32 to vector<8x192xf32>
    %214 = arith.select %212, %146, %213 : vector<8x192xi1>, vector<8x192xf32>
    %215 = arith.addf %210, %214 : vector<8x192xf32>
    %216 = vector.extract_strided_slice %142 {offsets = [3, 0], sizes = [1, 192], strides = [1, 1]} : vector<11x192xf32> to vector<1x192xf32>
    %217 = vector.broadcast %216 : vector<1x192xf32> to vector<8x192xf32>
    %218 = arith.mulf %215, %217 : vector<8x192xf32>
    %219 = arith.addf %202, %218 : vector<8x192xf32>
    %220 = vector.extract_strided_slice %143 {offsets = [3, 0], sizes = [1, 192], strides = [1, 1]} : vector<11x192xf32> to vector<1x192xf32>
    %221 = vector.broadcast %220 : vector<1x192xf32> to vector<8x192xf32>
    %222 = arith.mulf %215, %221 : vector<8x192xf32>
    %223 = arith.addf %206, %222 : vector<8x192xf32>
    %c4_i32 = arith.constant 4 : i32
    %224 = vector.broadcast %c4_i32 : i32 to vector<8x192xi32>
    %225 = arith.cmpi eq, %149, %224 : vector<8x192xi32>
    %cst_68 = arith.constant 0.000000e+00 : f32
    %226 = vector.broadcast %cst_68 : f32 to vector<8x192xf32>
    %227 = arith.select %225, %148, %226 : vector<8x192xi1>, vector<8x192xf32>
    %c3_i32_69 = arith.constant 3 : i32
    %228 = vector.broadcast %c3_i32_69 : i32 to vector<8x192xi32>
    %229 = arith.cmpi eq, %149, %228 : vector<8x192xi32>
    %cst_70 = arith.constant 0.000000e+00 : f32
    %230 = vector.broadcast %cst_70 : f32 to vector<8x192xf32>
    %231 = arith.select %229, %146, %230 : vector<8x192xi1>, vector<8x192xf32>
    %232 = arith.addf %227, %231 : vector<8x192xf32>
    %233 = vector.extract_strided_slice %142 {offsets = [4, 0], sizes = [1, 192], strides = [1, 1]} : vector<11x192xf32> to vector<1x192xf32>
    %234 = vector.broadcast %233 : vector<1x192xf32> to vector<8x192xf32>
    %235 = arith.mulf %232, %234 : vector<8x192xf32>
    %236 = arith.addf %219, %235 : vector<8x192xf32>
    %237 = vector.extract_strided_slice %143 {offsets = [4, 0], sizes = [1, 192], strides = [1, 1]} : vector<11x192xf32> to vector<1x192xf32>
    %238 = vector.broadcast %237 : vector<1x192xf32> to vector<8x192xf32>
    %239 = arith.mulf %232, %238 : vector<8x192xf32>
    %240 = arith.addf %223, %239 : vector<8x192xf32>
    %c5_i32 = arith.constant 5 : i32
    %241 = vector.broadcast %c5_i32 : i32 to vector<8x192xi32>
    %242 = arith.cmpi eq, %149, %241 : vector<8x192xi32>
    %cst_71 = arith.constant 0.000000e+00 : f32
    %243 = vector.broadcast %cst_71 : f32 to vector<8x192xf32>
    %244 = arith.select %242, %148, %243 : vector<8x192xi1>, vector<8x192xf32>
    %c4_i32_72 = arith.constant 4 : i32
    %245 = vector.broadcast %c4_i32_72 : i32 to vector<8x192xi32>
    %246 = arith.cmpi eq, %149, %245 : vector<8x192xi32>
    %cst_73 = arith.constant 0.000000e+00 : f32
    %247 = vector.broadcast %cst_73 : f32 to vector<8x192xf32>
    %248 = arith.select %246, %146, %247 : vector<8x192xi1>, vector<8x192xf32>
    %249 = arith.addf %244, %248 : vector<8x192xf32>
    %250 = vector.extract_strided_slice %142 {offsets = [5, 0], sizes = [1, 192], strides = [1, 1]} : vector<11x192xf32> to vector<1x192xf32>
    %251 = vector.broadcast %250 : vector<1x192xf32> to vector<8x192xf32>
    %252 = arith.mulf %249, %251 : vector<8x192xf32>
    %253 = arith.addf %236, %252 : vector<8x192xf32>
    %254 = vector.extract_strided_slice %143 {offsets = [5, 0], sizes = [1, 192], strides = [1, 1]} : vector<11x192xf32> to vector<1x192xf32>
    %255 = vector.broadcast %254 : vector<1x192xf32> to vector<8x192xf32>
    %256 = arith.mulf %249, %255 : vector<8x192xf32>
    %257 = arith.addf %240, %256 : vector<8x192xf32>
    %c6_i32 = arith.constant 6 : i32
    %258 = vector.broadcast %c6_i32 : i32 to vector<8x192xi32>
    %259 = arith.cmpi eq, %149, %258 : vector<8x192xi32>
    %cst_74 = arith.constant 0.000000e+00 : f32
    %260 = vector.broadcast %cst_74 : f32 to vector<8x192xf32>
    %261 = arith.select %259, %148, %260 : vector<8x192xi1>, vector<8x192xf32>
    %c5_i32_75 = arith.constant 5 : i32
    %262 = vector.broadcast %c5_i32_75 : i32 to vector<8x192xi32>
    %263 = arith.cmpi eq, %149, %262 : vector<8x192xi32>
    %cst_76 = arith.constant 0.000000e+00 : f32
    %264 = vector.broadcast %cst_76 : f32 to vector<8x192xf32>
    %265 = arith.select %263, %146, %264 : vector<8x192xi1>, vector<8x192xf32>
    %266 = arith.addf %261, %265 : vector<8x192xf32>
    %267 = vector.extract_strided_slice %142 {offsets = [6, 0], sizes = [1, 192], strides = [1, 1]} : vector<11x192xf32> to vector<1x192xf32>
    %268 = vector.broadcast %267 : vector<1x192xf32> to vector<8x192xf32>
    %269 = arith.mulf %266, %268 : vector<8x192xf32>
    %270 = arith.addf %253, %269 : vector<8x192xf32>
    %271 = vector.extract_strided_slice %143 {offsets = [6, 0], sizes = [1, 192], strides = [1, 1]} : vector<11x192xf32> to vector<1x192xf32>
    %272 = vector.broadcast %271 : vector<1x192xf32> to vector<8x192xf32>
    %273 = arith.mulf %266, %272 : vector<8x192xf32>
    %274 = arith.addf %257, %273 : vector<8x192xf32>
    %c7_i32 = arith.constant 7 : i32
    %275 = vector.broadcast %c7_i32 : i32 to vector<8x192xi32>
    %276 = arith.cmpi eq, %149, %275 : vector<8x192xi32>
    %cst_77 = arith.constant 0.000000e+00 : f32
    %277 = vector.broadcast %cst_77 : f32 to vector<8x192xf32>
    %278 = arith.select %276, %148, %277 : vector<8x192xi1>, vector<8x192xf32>
    %c6_i32_78 = arith.constant 6 : i32
    %279 = vector.broadcast %c6_i32_78 : i32 to vector<8x192xi32>
    %280 = arith.cmpi eq, %149, %279 : vector<8x192xi32>
    %cst_79 = arith.constant 0.000000e+00 : f32
    %281 = vector.broadcast %cst_79 : f32 to vector<8x192xf32>
    %282 = arith.select %280, %146, %281 : vector<8x192xi1>, vector<8x192xf32>
    %283 = arith.addf %278, %282 : vector<8x192xf32>
    %284 = vector.extract_strided_slice %142 {offsets = [7, 0], sizes = [1, 192], strides = [1, 1]} : vector<11x192xf32> to vector<1x192xf32>
    %285 = vector.broadcast %284 : vector<1x192xf32> to vector<8x192xf32>
    %286 = arith.mulf %283, %285 : vector<8x192xf32>
    %287 = arith.addf %270, %286 : vector<8x192xf32>
    %288 = vector.extract_strided_slice %143 {offsets = [7, 0], sizes = [1, 192], strides = [1, 1]} : vector<11x192xf32> to vector<1x192xf32>
    %289 = vector.broadcast %288 : vector<1x192xf32> to vector<8x192xf32>
    %290 = arith.mulf %283, %289 : vector<8x192xf32>
    %291 = arith.addf %274, %290 : vector<8x192xf32>
    %c8_i32 = arith.constant 8 : i32
    %292 = vector.broadcast %c8_i32 : i32 to vector<8x192xi32>
    %293 = arith.cmpi eq, %149, %292 : vector<8x192xi32>
    %cst_80 = arith.constant 0.000000e+00 : f32
    %294 = vector.broadcast %cst_80 : f32 to vector<8x192xf32>
    %295 = arith.select %293, %148, %294 : vector<8x192xi1>, vector<8x192xf32>
    %c7_i32_81 = arith.constant 7 : i32
    %296 = vector.broadcast %c7_i32_81 : i32 to vector<8x192xi32>
    %297 = arith.cmpi eq, %149, %296 : vector<8x192xi32>
    %cst_82 = arith.constant 0.000000e+00 : f32
    %298 = vector.broadcast %cst_82 : f32 to vector<8x192xf32>
    %299 = arith.select %297, %146, %298 : vector<8x192xi1>, vector<8x192xf32>
    %300 = arith.addf %295, %299 : vector<8x192xf32>
    %301 = vector.extract_strided_slice %142 {offsets = [8, 0], sizes = [1, 192], strides = [1, 1]} : vector<11x192xf32> to vector<1x192xf32>
    %302 = vector.broadcast %301 : vector<1x192xf32> to vector<8x192xf32>
    %303 = arith.mulf %300, %302 : vector<8x192xf32>
    %304 = arith.addf %287, %303 : vector<8x192xf32>
    %305 = vector.extract_strided_slice %143 {offsets = [8, 0], sizes = [1, 192], strides = [1, 1]} : vector<11x192xf32> to vector<1x192xf32>
    %306 = vector.broadcast %305 : vector<1x192xf32> to vector<8x192xf32>
    %307 = arith.mulf %300, %306 : vector<8x192xf32>
    %308 = arith.addf %291, %307 : vector<8x192xf32>
    %c9_i32 = arith.constant 9 : i32
    %309 = vector.broadcast %c9_i32 : i32 to vector<8x192xi32>
    %310 = arith.cmpi eq, %149, %309 : vector<8x192xi32>
    %cst_83 = arith.constant 0.000000e+00 : f32
    %311 = vector.broadcast %cst_83 : f32 to vector<8x192xf32>
    %312 = arith.select %310, %148, %311 : vector<8x192xi1>, vector<8x192xf32>
    %c8_i32_84 = arith.constant 8 : i32
    %313 = vector.broadcast %c8_i32_84 : i32 to vector<8x192xi32>
    %314 = arith.cmpi eq, %149, %313 : vector<8x192xi32>
    %cst_85 = arith.constant 0.000000e+00 : f32
    %315 = vector.broadcast %cst_85 : f32 to vector<8x192xf32>
    %316 = arith.select %314, %146, %315 : vector<8x192xi1>, vector<8x192xf32>
    %317 = arith.addf %312, %316 : vector<8x192xf32>
    %318 = vector.extract_strided_slice %142 {offsets = [9, 0], sizes = [1, 192], strides = [1, 1]} : vector<11x192xf32> to vector<1x192xf32>
    %319 = vector.broadcast %318 : vector<1x192xf32> to vector<8x192xf32>
    %320 = arith.mulf %317, %319 : vector<8x192xf32>
    %321 = arith.addf %304, %320 : vector<8x192xf32>
    %322 = vector.extract_strided_slice %143 {offsets = [9, 0], sizes = [1, 192], strides = [1, 1]} : vector<11x192xf32> to vector<1x192xf32>
    %323 = vector.broadcast %322 : vector<1x192xf32> to vector<8x192xf32>
    %324 = arith.mulf %317, %323 : vector<8x192xf32>
    %325 = arith.addf %308, %324 : vector<8x192xf32>
    %c10_i32_86 = arith.constant 10 : i32
    %326 = vector.broadcast %c10_i32_86 : i32 to vector<8x192xi32>
    %327 = arith.cmpi eq, %149, %326 : vector<8x192xi32>
    %cst_87 = arith.constant 0.000000e+00 : f32
    %328 = vector.broadcast %cst_87 : f32 to vector<8x192xf32>
    %329 = arith.select %327, %148, %328 : vector<8x192xi1>, vector<8x192xf32>
    %c9_i32_88 = arith.constant 9 : i32
    %330 = vector.broadcast %c9_i32_88 : i32 to vector<8x192xi32>
    %331 = arith.cmpi eq, %149, %330 : vector<8x192xi32>
    %cst_89 = arith.constant 0.000000e+00 : f32
    %332 = vector.broadcast %cst_89 : f32 to vector<8x192xf32>
    %333 = arith.select %331, %146, %332 : vector<8x192xi1>, vector<8x192xf32>
    %334 = arith.addf %329, %333 : vector<8x192xf32>
    %335 = vector.extract_strided_slice %142 {offsets = [10, 0], sizes = [1, 192], strides = [1, 1]} : vector<11x192xf32> to vector<1x192xf32>
    %336 = vector.broadcast %335 : vector<1x192xf32> to vector<8x192xf32>
    %337 = arith.mulf %334, %336 : vector<8x192xf32>
    %338 = arith.addf %321, %337 : vector<8x192xf32>
    %339 = vector.extract_strided_slice %143 {offsets = [10, 0], sizes = [1, 192], strides = [1, 1]} : vector<11x192xf32> to vector<1x192xf32>
    %340 = vector.broadcast %339 : vector<1x192xf32> to vector<8x192xf32>
    %341 = arith.mulf %334, %340 : vector<8x192xf32>
    %342 = arith.addf %325, %341 : vector<8x192xf32>
    %343 = vector.extract_strided_slice %153 {offsets = [0, 0], sizes = [1, 192], strides = [1, 1]} : vector<2x192xf32> to vector<1x192xf32>
    %344 = vector.broadcast %343 : vector<1x192xf32> to vector<8x192xf32>
    %345 = arith.mulf %338, %344 : vector<8x192xf32>
    %346 = vector.extract_strided_slice %153 {offsets = [1, 0], sizes = [1, 192], strides = [1, 1]} : vector<2x192xf32> to vector<1x192xf32>
    %347 = vector.broadcast %346 : vector<1x192xf32> to vector<8x192xf32>
    %348 = arith.mulf %342, %347 : vector<8x192xf32>
    %c0_90 = arith.constant 0 : index
    %c0_91 = arith.constant 0 : index
    %349 = vector.load %arg6[%c0_90, %c0_91] : memref<192x128xf32, #tpu.memory_space<vmem>>, vector<192x128xf32>
    %cst_92 = arith.constant dense<0.000000e+00> : vector<8x128xf32>
    %350 = tpu.matmul %345, %349, %cst_92 {dimension_numbers = #tpu.dot_dimension_numbers<[1], [0], [0], [1], [0, 0, 1, 1], [], []>} : vector<8x192xf32>, vector<192x128xf32>, vector<8x128xf32> -> vector<8x128xf32>
    %c0_93 = arith.constant 0 : index
    %c0_94 = arith.constant 0 : index
    %351 = vector.load %arg7[%c0_93, %c0_94] : memref<192x128xf32, #tpu.memory_space<vmem>>, vector<192x128xf32>
    %cst_95 = arith.constant dense<0.000000e+00> : vector<8x128xf32>
    %352 = tpu.matmul %348, %351, %cst_95 {dimension_numbers = #tpu.dot_dimension_numbers<[1], [0], [0], [1], [0, 0, 1, 1], [], []>} : vector<8x192xf32>, vector<192x128xf32>, vector<8x128xf32> -> vector<8x128xf32>
    %353 = arith.addf %350, %352 : vector<8x128xf32>
    %c0_96 = arith.constant 0 : index
    %c0_97 = arith.constant 0 : index
    %354 = vector.load %arg8[%c0_96, %c0_97] : memref<8x128xf32, #tpu.memory_space<vmem>>, vector<8x128xf32>
    tpu.vector_store %arg8[%c0_96, %c0_97], %353 {strides = array<i32>} : memref<8x128xf32, #tpu.memory_space<vmem>>, vector<8x128xf32>,
    return
  }
}

</mosaic_0001>

<llo_original>
// kernel: tpu_custom_call.1
$region0: #{tpu_custom_call.1}
  #allocation0 [shape = 'u32[]', space=smem, size = 0x4, offset = 0x4, fixed_abs, tag = 'smem constant byte address 0x4 - core index']
  #allocation1 [shape = 'u32[144,128]{1,0:T(1,128)}', space=vmem, size = 0x12000, scoped, tag = 'internal scratch']
  %s0 = inlined_call_operand.hbm [shape: f32[2,6], index: 0, kind: input, shape index: {}]
  %s1 = inlined_call_operand.hbm [shape: f32[11,11], index: 1, kind: input, shape index: {}]
  %s2 = inlined_call_operand.vmem [shape: f32[1,192], index: 2, kind: input, shape index: {}]
  %s3 = inlined_call_operand.hbm [shape: f32[8,192], index: 3, kind: input, shape index: {}]
  %s4 = inlined_call_operand.vmem [shape: f32[2,192], index: 4, kind: input, shape index: {}]
  %s5 = inlined_call_operand.vmem [shape: f32[1,192], index: 5, kind: input, shape index: {}]
  %s6 = inlined_call_operand.hbm [shape: f32[192,128], index: 6, kind: input, shape index: {}]
  %s7 = inlined_call_operand.hbm [shape: f32[192,128], index: 7, kind: input, shape index: {}]
  %s8 = inlined_call_operand.hbm [shape: f32[8,128], index: 8, kind: output, shape index: {}]
  %s9 = sld [smem:[#allocation0]]
  $region62: #{tpu_custom_call.1} parent=0
    _
  %s11 = ssub.s32 1, %s9
  %s12 = scalar_select 0, %s11, %s9
  $region1: #{tpu_custom_call.1} parent=0
    #allocation2 [shape = 'u8[1024]{0}', space=smem, size = 0x400, scoped, tag = 'input window, operand 0, single buffered']
    #allocation3 [shape = 's32[1]{0}', space=sflag, size = 0x4, scoped, tag = 'scoped memory for tpu_custom_call.1']
    #allocation4 [shape = 's32[1]{0}', space=sflag, size = 0x4, scoped, tag = 'scoped memory for tpu_custom_call.1']
    #allocation5 [shape = 's32[1]{0}', space=sflag, size = 0x4, scoped, tag = 'scoped memory for tpu_custom_call.1']
    #allocation6 [shape = 'u8[8192]{0}', space=vmem, size = 0x2000, scoped, tag = 'input window, operand 1, single buffered']
    #allocation7 [shape = 'u8[8192]{0}', space=vmem, size = 0x2000, scoped, tag = 'input window, operand 3, single buffered']
    #allocation8 [shape = 's32[1]{0}', space=sflag, size = 0x4, scoped, tag = 'scoped memory for tpu_custom_call.1']
    #allocation9 [shape = 'u8[98304]{0}', space=vmem, size = 0x18000, scoped, tag = 'input window, operand 6, single buffered']
    #allocation10 [shape = 'u8[98304]{0}', space=vmem, size = 0x18000, scoped, tag = 'input window, operand 7, single buffered']
    #allocation11 [shape = 's32[1]{0}', space=sflag, size = 0x4, scoped, tag = 'scoped memory for tpu_custom_call.1']
    #allocation12 [shape = 'u8[4096]{0}', space=vmem, size = 0x1000, scoped, tag = 'output window, operand 0, single buffered']
    %13 = vsyncpa [#allocation5], 0
    %14 = vsyncpa [#allocation3], 0
    %15 = vsyncpa [#allocation8], 0
    %16 = vsyncpa [#allocation11], 0
    %17 = vsyncpa [#allocation4], 0
    // Predicated region
    $region2: #{tpu_custom_call.1} parent=1 // pred_check
      _
    $region3: #{tpu_custom_call.1} parent=1 // pred_check_branch
      %19 = sbr.rel (0) target = $region5
    $region4: #{tpu_custom_call.1} parent=1 // pred_region
      %s21 = ssub.s32 32, 32
      %22 = vsyncadd [#allocation5], %s21
      %25 = dma.hbm_to_smem %s0, 32, [#allocation2], [#allocation5]
    $region5: #{tpu_custom_call.1} parent=1 // pred_fallthru
      _
    // Predicated region
    $region6: #{tpu_custom_call.1} parent=1 // pred_check
      _
    $region7: #{tpu_custom_call.1} parent=1 // pred_check_branch
      %27 = sbr.rel (0) target = $region9
    $region8: #{tpu_custom_call.1} parent=1 // pred_region
      %s29 = ssub.s32 256, 256
      %30 = vsyncadd [#allocation3], %s29
      %s31 = sshll.u32 [#allocation6], 4
      %s32 = int_to_ptr.vmem [resolvable:$true] %s31
      %37 = dma.hbm_to_vmem [thread:$0]  %s1, 256, %s32, [#allocation3], 128, 128, 8
    $region9: #{tpu_custom_call.1} parent=1 // pred_fallthru
      _
    // Predicated region
    $region10: #{tpu_custom_call.1} parent=1 // pred_check
      _
    $region11: #{tpu_custom_call.1} parent=1 // pred_check_branch
      %39 = sbr.rel (0) target = $region13
    $region12: #{tpu_custom_call.1} parent=1 // pred_region
      _
    $region13: #{tpu_custom_call.1} parent=1 // pred_fallthru
      _
    // Predicated region
    $region14: #{tpu_custom_call.1} parent=1 // pred_check
      _
    $region15: #{tpu_custom_call.1} parent=1 // pred_check_branch
      %41 = sbr.rel (0) target = $region17
    $region16: #{tpu_custom_call.1} parent=1 // pred_region
      %s43 = ssub.s32 256, 256
      %44 = vsyncadd [#allocation8], %s43
      %s46 = sshll.u32 [#allocation7], 4
      %s47 = int_to_ptr.vmem [resolvable:$true] %s46
      %49 = dma.hbm_to_vmem [thread:$0]  %s3, 256, %s47, [#allocation8]
    $region17: #{tpu_custom_call.1} parent=1 // pred_fallthru
      _
    // Predicated region
    $region18: #{tpu_custom_call.1} parent=1 // pred_check
      _
    $region19: #{tpu_custom_call.1} parent=1 // pred_check_branch
      %51 = sbr.rel (0) target = $region21
    $region20: #{tpu_custom_call.1} parent=1 // pred_region
      _
    $region21: #{tpu_custom_call.1} parent=1 // pred_fallthru
      _
    // Predicated region
    $region22: #{tpu_custom_call.1} parent=1 // pred_check
      _
    $region23: #{tpu_custom_call.1} parent=1 // pred_check_branch
      %53 = sbr.rel (0) target = $region25
    $region24: #{tpu_custom_call.1} parent=1 // pred_region
      _
    $region25: #{tpu_custom_call.1} parent=1 // pred_fallthru
      _
    // Predicated region
    $region26: #{tpu_custom_call.1} parent=1 // pred_check
      _
    $region27: #{tpu_custom_call.1} parent=1 // pred_check_branch
      %55 = sbr.rel (0) target = $region29
    $region28: #{tpu_custom_call.1} parent=1 // pred_region
      %s57 = ssub.s32 3072, 3072
      %58 = vsyncadd [#allocation8], %s57
      %s59 = sshll.u32 [#allocation9], 4
      %s60 = int_to_ptr.vmem [resolvable:$true] %s59
      %65 = dma.hbm_to_vmem [thread:$0]  %s6, 3072, %s60, [#allocation8], 128, 128, 8
    $region29: #{tpu_custom_call.1} parent=1 // pred_fallthru
      _
    // Predicated region
    $region30: #{tpu_custom_call.1} parent=1 // pred_check
      _
    $region31: #{tpu_custom_call.1} parent=1 // pred_check_branch
      %67 = sbr.rel (0) target = $region33
    $region32: #{tpu_custom_call.1} parent=1 // pred_region
      %s69 = ssub.s32 3072, 3072
      %70 = vsyncadd [#allocation11], %s69
      %s71 = sshll.u32 [#allocation10], 4
      %s72 = int_to_ptr.vmem [resolvable:$true] %s71
      %77 = dma.hbm_to_vmem [thread:$0]  %s7, 3072, %s72, [#allocation11], 128, 128, 8
    $region33: #{tpu_custom_call.1} parent=1 // pred_fallthru
      _
    // Predicated region
    $region34: #{tpu_custom_call.1} parent=1 // pred_check
      _
    $region35: #{tpu_custom_call.1} parent=1 // pred_check_branch
      %79 = sbr.rel (0) target = $region37
    $region36: #{tpu_custom_call.1} parent=1 // pred_region
      %80 = dma.done [#allocation5], 32
    $region37: #{tpu_custom_call.1} parent=1 // pred_fallthru
      _
    // Predicated region
    $region38: #{tpu_custom_call.1} parent=1 // pred_check
      _
    $region39: #{tpu_custom_call.1} parent=1 // pred_check_branch
      %82 = sbr.rel (0) target = $region41
    $region40: #{tpu_custom_call.1} parent=1 // pred_region
      %83 = dma.done [#allocation3], 256
    $region41: #{tpu_custom_call.1} parent=1 // pred_fallthru
      _
    // Predicated region
    $region42: #{tpu_custom_call.1} parent=1 // pred_check
      _
    $region43: #{tpu_custom_call.1} parent=1 // pred_check_branch
      %85 = sbr.rel (0) target = $region45
    $region44: #{tpu_custom_call.1} parent=1 // pred_region
      %86 = dma.done [#allocation8], 256
    $region45: #{tpu_custom_call.1} parent=1 // pred_fallthru
      _
    // Predicated region
    $region46: #{tpu_custom_call.1} parent=1 // pred_check
      _
    $region47: #{tpu_custom_call.1} parent=1 // pred_check_branch
      %88 = sbr.rel (0) target = $region49
    $region48: #{tpu_custom_call.1} parent=1 // pred_region
      %89 = dma.done [#allocation8], 3072
    $region49: #{tpu_custom_call.1} parent=1 // pred_fallthru
      _
    // Predicated region
    $region50: #{tpu_custom_call.1} parent=1 // pred_check
      _
    $region51: #{tpu_custom_call.1} parent=1 // pred_check_branch
      %91 = sbr.rel (0) target = $region53
    $region52: #{tpu_custom_call.1} parent=1 // pred_region
      %92 = dma.done [#allocation11], 3072
    $region53: #{tpu_custom_call.1} parent=1 // pred_fallthru
      _
    %93 = sfence
    %v94 = vld [vmem:[#allocation6] sm:$0xff]
    %v95 = vld [vmem:[#allocation6 + $0x8] sm:$0x7]
    %v96 = vmul.f32 %v94, %v94
    %v97 = vmul.f32 %v95, %v95
    %v98 = vlaneseq
    %v99 = vshrl.u32 %v98, 7
    %v100 = vadd.s32 %v99, 8
    %v101 = vlaneseq
    %v102 = vand.u32 %v101, 127
    %vm103 = vcmp.ge.s32.totalorder %v99, 1
    %vm104 = vcmp.ge.s32.totalorder %v100, 1
    %vm105 = vcmp.lt.s32.totalorder %v99, 10
    %vm106 = vcmp.lt.s32.totalorder %v100, 10
    %vm107 = vmand %vm103, %vm105
    %vm108 = vmand %vm104, %vm106
    %vm109 = vcmp.ge.s32.totalorder %v102, 1
    %vm110 = vmand %vm107, %vm109
    %vm111 = vmand %vm108, %vm109
    %vm112 = vcmp.lt.s32.totalorder %v102, 10
    %vm113 = vmand %vm110, %vm112
    %vm114 = vmand %vm111, %vm112
    %v115 = vsel %vm113, 1, 0
    %v116 = vsel %vm114, 1, 0
    %v117 = vcvt.s32.f32 %v115
    %v118 = vcvt.s32.f32 %v116
    %s119 = sld [smem:[#allocation2]]
    %v120 = vstv %s119
    %v121 = vmul.f32 %v120, 1.442695
    %v122 = vpow.pop %v121
    %s123 = vtos %v122
    %s124 = sld [smem:[#allocation2 + $0x1]]
    %v125 = vstv %s124
    %v126 = vmul.f32 %v125, 1.442695
    %v127 = vpow.pop %v126
    %s128 = vtos %v127
    %s129 = sld [smem:[#allocation2 + $0x2]]
    %v130 = vstv %s129
    %v131 = vmul.f32 %v130, 1.442695
    %v132 = vpow.pop %v131
    %s133 = vtos %v132
    %s134 = sld [smem:[#allocation2 + $0x3]]
    %v135 = vstv %s134
    %v136 = vmul.f32 %v135, 1.442695
    %v137 = vpow.pop %v136
    %s138 = vtos %v137
    %s139 = sld [smem:[#allocation2 + $0x4]]
    %v140 = vstv %s139
    %v141 = vmul.f32 %v140, 1.442695
    %v142 = vpow.pop %v141
    %s143 = vtos %v142
    %s144 = sld [smem:[#allocation2 + $0x5]]
    %v145 = vstv %s144
    %v146 = vmul.f32 %v145, 1.442695
    %v147 = vpow.pop %v146
    %s148 = vtos %v147
    %v149 = vsub.f32 0.0, %v96
    %v150 = vsub.f32 0.0, %v97
    %s151 = smul.f32 %s123, 2.0
    %v152 = vstv %s151
    %v153 = vrcp.pop %v152
    %v154 = vmul.f32 %v149, %v153
    %v155 = vmul.f32 %v150, %v153
    %v156 = vmul.f32 %v154, 1.442695
    %v157 = vpow.pop %v156
    %v158 = vmul.f32 %v155, 1.442695
    %v159 = vpow.pop %v158
    %s160 = smul.f32 %s128, 2.0
    %v161 = vstv %s160
    %v162 = vrcp.pop %v161
    %v163 = vmul.f32 %v149, %v162
    %v164 = vmul.f32 %v150, %v162
    %v165 = vmul.f32 %v163, 1.442695
    %v166 = vpow.pop %v165
    %v167 = vmul.f32 %v164, 1.442695
    %v168 = vpow.pop %v167
    %v169 = vstv %s143
    %v170 = vmul.f32 %v169, %v166
    %v171 = vmul.f32 %v169, %v168
    %s172 = smul.f32 %s138, -0.5
    %s173 = smul.f32 %s138, %s133
    %v174 = vstv %s173
    %v175 = vrcp.pop %v174
    %v176 = vmul.f32 %v96, %v175
    %v177 = vmul.f32 %v97, %v175
    %v178 = vadd.f32 %v176, 1.0
    %v179 = vadd.f32 %v177, 1.0
    %v180 = vlog2.pop %v178
    %v181 = vmul.f32 %v180, 0.6931472
    %v182 = vlog2.pop %v179
    %v183 = vmul.f32 %v182, 0.6931472
    %v184 = vstv %s172
    %v185 = vmul.f32 %v184, %v181
    %v186 = vmul.f32 %v184, %v183
    %v187 = vmul.f32 %v185, 1.442695
    %v188 = vpow.pop %v187
    %v189 = vmul.f32 %v186, 1.442695
    %v190 = vpow.pop %v189
    %v191 = vstv %s148
    %v192 = vmul.f32 %v191, %v188
    %v193 = vmul.f32 %v191, %v190
    %v194 = vadd.f32 %v157, %v170
    %v195 = vadd.f32 %v159, %v171
    %v196 = vadd.f32 %v194, %v192
    %v197 = vadd.f32 %v195, %v193
    %s198 = sadd.f32 %s143, 1.0
    %s199 = sadd.f32 %s198, %s148
    %v200 = vstv %s199
    %v201 = vrcp.pop %v200
    %v202 = vmul.f32 %v196, %v201
    %v203 = vmul.f32 %v197, %v201
    %vm204 = vcmask 89088
    %v205 = vsel %vm204, %v202, 0.0
    %vm206 = vcmask 83968
    %v207 = vsel %vm206, %v203, 0.0
    %v208 = vadd.f32 %v205, %v207
    %209 = vadd.xlane.f32.xlu0 %v208
    %v210 = vpop.xlane.xlu0 %209
    %v211 = vrot.slane %v210, 4
    %v212 = vadd.f32 %v210, %v211
    %v213 = vrot.slane %v212, 2
    %v214 = vadd.f32 %v212, %v213
    %v215 = vrot.slane %v214, 1
    %v216 = vadd.f32 %v214, %v215
    %s217 = vtos %v216
    %v218 = vstv %s217
    %v219 = vrcp.pop %v218
    %s220 = vtos %v219
    %v221 = vstv %s220
    %v222 = vmul.f32 %v202, %v221
    %v223 = vmul.f32 %v203, %v221
    %v224 = vmul.f32 %v222, %v117
    %v225 = vmul.f32 %v223, %v118
    %s226 = sld [smem:[#allocation2 + $0x80]]
    %v227 = vstv %s226
    %v228 = vmul.f32 %v227, 1.442695
    %v229 = vpow.pop %v228
    %s230 = vtos %v229
    %s231 = sld [smem:[#allocation2 + $0x81]]
    %v232 = vstv %s231
    %v233 = vmul.f32 %v232, 1.442695
    %v234 = vpow.pop %v233
    %s235 = vtos %v234
    %s236 = sld [smem:[#allocation2 + $0x82]]
    %v237 = vstv %s236
    %v238 = vmul.f32 %v237, 1.442695
    %v239 = vpow.pop %v238
    %s240 = vtos %v239
    %s241 = sld [smem:[#allocation2 + $0x83]]
    %v242 = vstv %s241
    %v243 = vmul.f32 %v242, 1.442695
    %v244 = vpow.pop %v243
    %s245 = vtos %v244
    %s246 = sld [smem:[#allocation2 + $0x84]]
    %v247 = vstv %s246
    %v248 = vmul.f32 %v247, 1.442695
    %v249 = vpow.pop %v248
    %s250 = vtos %v249
    %s251 = sld [smem:[#allocation2 + $0x85]]
    %v252 = vstv %s251
    %v253 = vmul.f32 %v252, 1.442695
    %v254 = vpow.pop %v253
    %s255 = vtos %v254
    %s256 = smul.f32 %s230, 2.0
    %v257 = vstv %s256
    %v258 = vrcp.pop %v257
    %v259 = vmul.f32 %v149, %v258
    %v260 = vmul.f32 %v150, %v258
    %v261 = vmul.f32 %v259, 1.442695
    %v262 = vpow.pop %v261
    %v263 = vmul.f32 %v260, 1.442695
    %v264 = vpow.pop %v263
    %s265 = smul.f32 %s235, 2.0
    %v266 = vstv %s265
    %v267 = vrcp.pop %v266
    %v268 = vmul.f32 %v149, %v267
    %v269 = vmul.f32 %v150, %v267
    %v270 = vmul.f32 %v268, 1.442695
    %v271 = vpow.pop %v270
    %v272 = vmul.f32 %v269, 1.442695
    %v273 = vpow.pop %v272
    %v274 = vstv %s250
    %v275 = vmul.f32 %v274, %v271
    %v276 = vmul.f32 %v274, %v273
    %s277 = smul.f32 %s245, -0.5
    %s278 = smul.f32 %s245, %s240
    %v279 = vstv %s278
    %v280 = vrcp.pop %v279
    %v281 = vmul.f32 %v96, %v280
    %v282 = vmul.f32 %v97, %v280
    %v283 = vadd.f32 %v281, 1.0
    %v284 = vadd.f32 %v282, 1.0
    %v285 = vlog2.pop %v283
    %v286 = vmul.f32 %v285, 0.6931472
    %v287 = vlog2.pop %v284
    %v288 = vmul.f32 %v287, 0.6931472
    %v289 = vstv %s277
    %v290 = vmul.f32 %v289, %v286
    %v291 = vmul.f32 %v289, %v288
    %v292 = vmul.f32 %v290, 1.442695
    %v293 = vpow.pop %v292
    %v294 = vmul.f32 %v291, 1.442695
    %v295 = vpow.pop %v294
    %v296 = vstv %s255
    %v297 = vmul.f32 %v296, %v293
    %v298 = vmul.f32 %v296, %v295
    %v299 = vadd.f32 %v262, %v275
    %v300 = vadd.f32 %v264, %v276
    %v301 = vadd.f32 %v299, %v297
    %v302 = vadd.f32 %v300, %v298
    %s303 = sadd.f32 %s250, 1.0
    %s304 = sadd.f32 %s303, %s255
    %v305 = vstv %s304
    %v306 = vrcp.pop %v305
    %v307 = vmul.f32 %v301, %v306
    %v308 = vmul.f32 %v302, %v306
    %v309 = vsel %vm204, %v307, 0.0
    %v310 = vsel %vm206, %v308, 0.0
    %v311 = vadd.f32 %v309, %v310
    %312 = vadd.xlane.f32.xlu0 %v311
    %v313 = vpop.xlane.xlu0 %312
    %v314 = vrot.slane %v313, 4
    %v315 = vadd.f32 %v313, %v314
    %v316 = vrot.slane %v315, 2
    %v317 = vadd.f32 %v315, %v316
    %v318 = vrot.slane %v317, 1
    %v319 = vadd.f32 %v317, %v318
    %s320 = vtos %v319
    %v321 = vstv %s320
    %v322 = vrcp.pop %v321
    %s323 = vtos %v322
    %v324 = vstv %s323
    %v325 = vmul.f32 %v307, %v324
    %v326 = vmul.f32 %v308, %v324
    %v327 = vmul.f32 %v325, %v117
    %v328 = vmul.f32 %v326, %v118
    %v329 = vld [vmem:[%s2] sm:$0x3]
    %v331 = vlaneseq
    %v332 = vshrl.u32 %v331, 7
    %v333 = vsub.s32 0, %v332
    %v334 = vrot.slane %v329, %v333
    %v335 = vlaneseq
    %v336 = vshrl.u32 %v335, 7
    %v337 = vsub.s32 1, %v336
    %v338 = vrot.slane %v329, %v337
    %v341 = vfloor.f32 %v334
    %v342 = vfloor.f32 %v338
    %v343 = vsub.f32 %v334, %v341
    %v344 = vsub.f32 %v338, %v342
    %v345 = vsub.f32 1.0, %v343
    %v346 = vsub.f32 1.0, %v344
    %v347 = vcvt.f32.s32.to.zero.pseudo %v341
    %v348 = vcvt.f32.s32.to.zero.pseudo %v342
    %vm349 = vcmp.eq.s32.totalorder %v99, %v347
    %vm350 = vcmp.eq.s32.totalorder %v99, %v348
    %vm351 = vcmp.eq.s32.totalorder %v100, %v347
    %vm352 = vcmp.eq.s32.totalorder %v100, %v348
    %v353 = vsel %vm349, 1, 0
    %v354 = vsel %vm350, 1, 0
    %v355 = vsel %vm351, 1, 0
    %v356 = vsel %vm352, 1, 0
    %v357 = vcvt.s32.f32 %v353
    %v358 = vcvt.s32.f32 %v354
    %v359 = vcvt.s32.f32 %v355
    %v360 = vcvt.s32.f32 %v356
    %v361 = vmul.f32 %v357, %v345
    %v362 = vmul.f32 %v358, %v346
    %v363 = vmul.f32 %v359, %v345
    %v364 = vmul.f32 %v360, %v346
    %v365 = vadd.s32 %v347, 1
    %v366 = vadd.s32 %v348, 1
    %vm367 = vcmp.eq.s32.totalorder %v99, %v365
    %vm368 = vcmp.eq.s32.totalorder %v99, %v366
    %vm369 = vcmp.eq.s32.totalorder %v100, %v365
    %vm370 = vcmp.eq.s32.totalorder %v100, %v366
    %v371 = vsel %vm367, 1, 0
    %v372 = vsel %vm368, 1, 0
    %v373 = vsel %vm369, 1, 0
    %v374 = vsel %vm370, 1, 0
    %v375 = vcvt.s32.f32 %v371
    %v376 = vcvt.s32.f32 %v372
    %v377 = vcvt.s32.f32 %v373
    %v378 = vcvt.s32.f32 %v374
    %v379 = vmul.f32 %v375, %v343
    %v380 = vmul.f32 %v376, %v344
    %v381 = vmul.f32 %v377, %v343
    %v382 = vmul.f32 %v378, %v344
    %v383 = vadd.f32 %v361, %v379
    %v384 = vadd.f32 %v362, %v380
    %v385 = vadd.f32 %v363, %v381
    %v386 = vadd.f32 %v364, %v382
    %387 = vxpose.xlu0.b32.start [1/16] %v224, 128
    %388 = vxpose.xlu0.b32.cont [2/16] %v225, 128
    %389 = vxpose.xlu0.b32.cont [3/16] 0.0, 128
    %390 = vxpose.xlu0.b32.cont [4/16] 0.0, 128
    %391 = vxpose.xlu0.b32.cont [5/16] 0.0, 128
    %392 = vxpose.xlu0.b32.cont [6/16] 0.0, 128
    %393 = vxpose.xlu0.b32.cont [7/16] 0.0, 128
    %394 = vxpose.xlu0.b32.cont [8/16] 0.0, 128
    %395 = vxpose.xlu0.b32.cont [9/16] 0.0, 128
    %396 = vxpose.xlu0.b32.cont [10/16] 0.0, 128
    %397 = vxpose.xlu0.b32.cont [11/16] 0.0, 128
    %398 = vxpose.xlu0.b32.cont [12/16] 0.0, 128
    %399 = vxpose.xlu0.b32.cont [13/16] 0.0, 128
    %400 = vxpose.xlu0.b32.cont [14/16] 0.0, 128
    %401 = vxpose.xlu0.b32.cont [15/16] 0.0, 128
    %402 = vxpose.xlu0.b32.end [16/16] 0.0, 128
    %v403 = vpop.trf.xlu0
    %v404 = vpop.trf.xlu0
    %v405 = vpop.trf.xlu0
    %v406 = vpop.trf.xlu0
    %v407 = vpop.trf.xlu0
    %v408 = vpop.trf.xlu0
    %v409 = vpop.trf.xlu0
    %v410 = vpop.trf.xlu0
    %v411 = vpop.trf.xlu0
    %v412 = vpop.trf.xlu0
    %v413 = vpop.trf.xlu0
    %v414 = vpop.trf.xlu0
    %v415 = vpop.trf.xlu0
    %v416 = vpop.trf.xlu0
    %v417 = vpop.trf.xlu0
    %v418 = vpop.trf.xlu0
    %v420 = vsel %vm204, %v403, 0
    %v423 = vsel %vm204, %v404, 0
    %vm425 = vcmask 1042432
    %v427 = vsel %vm425, %v385, 0
    %v430 = vsel %vm425, %v386, 0
    %432 = vmatprep.subr.mxu0 %v384
    %433 = vmatpush1.msra.mxu0 %v383
    %434 = vmatprep.subr.mxu0 %v430
    %435 = vmatpush1.msra.mxu0 %v427
    %436 = vmatprep.subr.mxu0 0.0
    %437 = vmatpush1.msra.mxu0 0.0
    %438 = vmatprep.subr.mxu0 0.0
    %439 = vmatpush1.msra.mxu0 0.0
    %440 = vmatprep.subr.mxu0 0.0
    %441 = vmatpush1.msra.mxu0 0.0
    %442 = vmatprep.subr.mxu0 0.0
    %443 = vmatpush1.msra.mxu0 0.0
    %444 = vmatprep.subr.mxu0 0.0
    %445 = vmatpush1.msra.mxu0 0.0
    %446 = vmatprep.subr.mxu0 0.0
    %447 = vmatpush1.msra.mxu0 0.0
    %448 = vmatprep.subr.mxu0 0.0
    %449 = vmatpush1.msra.mxu0 0.0
    %450 = vmatprep.subr.mxu0 0.0
    %451 = vmatpush1.msra.mxu0 0.0
    %452 = vmatprep.subr.mxu0 0.0
    %453 = vmatpush1.msra.mxu0 0.0
    %454 = vmatprep.subr.mxu0 0.0
    %455 = vmatpush1.msra.mxu0 0.0
    %456 = vmatprep.subr.mxu0 0.0
    %457 = vmatpush1.msra.mxu0 0.0
    %458 = vmatprep.subr.mxu0 0.0
    %459 = vmatpush1.msra.mxu0 0.0
    %460 = vmatprep.subr.mxu0 0.0
    %461 = vmatpush1.msra.mxu0 0.0
    %462 = vmatprep.subr.mxu0 0.0
    %463 = vmatpush1.msra.mxu0 0.0
    %464 = vmatprep.subr.mxu0 0.0
    %465 = vmatpush1.msra.mxu0 0.0
    %466 = vmatprep.subr.mxu0 0.0
    %467 = vmatpush1.msra.mxu0 0.0
    %468 = vmatprep.subr.mxu0 0.0
    %469 = vmatpush1.msra.mxu0 0.0
    %470 = vmatprep.subr.mxu0 0.0
    %471 = vmatpush1.msra.mxu0 0.0
    %472 = vmatprep.subr.mxu0 0.0
    %473 = vmatpush1.msra.mxu0 0.0
    %474 = vmatprep.subr.mxu0 0.0
    %475 = vmatpush1.msra.mxu0 0.0
    %476 = vmatprep.subr.mxu0 0.0
    %477 = vmatpush1.msra.mxu0 0.0
    %478 = vmatprep.subr.mxu0 0.0
    %479 = vmatpush1.msra.mxu0 0.0
    %480 = vmatprep.subr.mxu0 0.0
    %481 = vmatpush1.msra.mxu0 0.0
    %482 = vmatprep.subr.mxu0 0.0
    %483 = vmatpush1.msra.mxu0 0.0
    %484 = vmatprep.subr.mxu0 0.0
    %485 = vmatpush1.msra.mxu0 0.0
    %486 = vmatprep.subr.mxu0 0.0
    %487 = vmatpush1.msra.mxu0 0.0
    %488 = vmatprep.subr.mxu0 0.0
    %489 = vmatpush1.msra.mxu0 0.0
    %490 = vmatprep.subr.mxu0 0.0
    %491 = vmatpush1.msra.mxu0 0.0
    %492 = vmatprep.subr.mxu0 0.0
    %493 = vmatpush1.msra.mxu0 0.0
    %494 = vmatprep.subr.mxu0 0.0
    %495 = vmatpush1.msra.mxu0 0.0
    %496 = vmatprep.mubr.f32.mxu0 0.0
    %497 = vmatmul.mubr.f32.gmra.mrb[0].mxu0 %v420
    %v498 = vpop.f32.mrb[0].mxu0
    %v499 = vadd.f32 0.0, %v498
    %v500 = vpop.f32.mrb[0].mxu0
    %v501 = vadd.f32 0.0, %v500
    %502 = vmatprep.mubr.f32.mxu0 0.0
    %503 = vmatmul.mubr.f32.gmra.mrb[0].mxu0 %v423
    %v504 = vpop.f32.mrb[0].mxu0
    %v505 = vadd.f32 0.0, %v504
    %v506 = vpop.f32.mrb[0].mxu0
    %v507 = vadd.f32 0.0, %v506
    %508 = vdwg.mxu0
    %509 = vxpose.xlu0.b32.start [1/16] %v327, 128
    %510 = vxpose.xlu0.b32.cont [2/16] %v328, 128
    %511 = vxpose.xlu0.b32.cont [3/16] 0.0, 128
    %512 = vxpose.xlu0.b32.cont [4/16] 0.0, 128
    %513 = vxpose.xlu0.b32.cont [5/16] 0.0, 128
    %514 = vxpose.xlu0.b32.cont [6/16] 0.0, 128
    %515 = vxpose.xlu0.b32.cont [7/16] 0.0, 128
    %516 = vxpose.xlu0.b32.cont [8/16] 0.0, 128
    %517 = vxpose.xlu0.b32.cont [9/16] 0.0, 128
    %518 = vxpose.xlu0.b32.cont [10/16] 0.0, 128
    %519 = vxpose.xlu0.b32.cont [11/16] 0.0, 128
    %520 = vxpose.xlu0.b32.cont [12/16] 0.0, 128
    %521 = vxpose.xlu0.b32.cont [13/16] 0.0, 128
    %522 = vxpose.xlu0.b32.cont [14/16] 0.0, 128
    %523 = vxpose.xlu0.b32.cont [15/16] 0.0, 128
    %524 = vxpose.xlu0.b32.end [16/16] 0.0, 128
    %v525 = vpop.trf.xlu0
    %v526 = vpop.trf.xlu0
    %v527 = vpop.trf.xlu0
    %v528 = vpop.trf.xlu0
    %v529 = vpop.trf.xlu0
    %v530 = vpop.trf.xlu0
    %v531 = vpop.trf.xlu0
    %v532 = vpop.trf.xlu0
    %v533 = vpop.trf.xlu0
    %v534 = vpop.trf.xlu0
    %v535 = vpop.trf.xlu0
    %v536 = vpop.trf.xlu0
    %v537 = vpop.trf.xlu0
    %v538 = vpop.trf.xlu0
    %v539 = vpop.trf.xlu0
    %v540 = vpop.trf.xlu0
    %v542 = vsel %vm204, %v525, 0
    %v545 = vsel %vm204, %v526, 0
    %547 = vmatprep.subr.mxu0 %v384
    %548 = vmatpush1.msra.mxu0 %v383
    %549 = vmatprep.subr.mxu0 %v430
    %550 = vmatpush1.msra.mxu0 %v427
    %551 = vmatprep.subr.mxu0 0.0
    %552 = vmatpush1.msra.mxu0 0.0
    %553 = vmatprep.subr.mxu0 0.0
    %554 = vmatpush1.msra.mxu0 0.0
    %555 = vmatprep.subr.mxu0 0.0
    %556 = vmatpush1.msra.mxu0 0.0
    %557 = vmatprep.subr.mxu0 0.0
    %558 = vmatpush1.msra.mxu0 0.0
    %559 = vmatprep.subr.mxu0 0.0
    %560 = vmatpush1.msra.mxu0 0.0
    %561 = vmatprep.subr.mxu0 0.0
    %562 = vmatpush1.msra.mxu0 0.0
    %563 = vmatprep.subr.mxu0 0.0
    %564 = vmatpush1.msra.mxu0 0.0
    %565 = vmatprep.subr.mxu0 0.0
    %566 = vmatpush1.msra.mxu0 0.0
    %567 = vmatprep.subr.mxu0 0.0
    %568 = vmatpush1.msra.mxu0 0.0
    %569 = vmatprep.subr.mxu0 0.0
    %570 = vmatpush1.msra.mxu0 0.0
    %571 = vmatprep.subr.mxu0 0.0
    %572 = vmatpush1.msra.mxu0 0.0
    %573 = vmatprep.subr.mxu0 0.0
    %574 = vmatpush1.msra.mxu0 0.0
    %575 = vmatprep.subr.mxu0 0.0
    %576 = vmatpush1.msra.mxu0 0.0
    %577 = vmatprep.subr.mxu0 0.0
    %578 = vmatpush1.msra.mxu0 0.0
    %579 = vmatprep.subr.mxu0 0.0
    %580 = vmatpush1.msra.mxu0 0.0
    %581 = vmatprep.subr.mxu0 0.0
    %582 = vmatpush1.msra.mxu0 0.0
    %583 = vmatprep.subr.mxu0 0.0
    %584 = vmatpush1.msra.mxu0 0.0
    %585 = vmatprep.subr.mxu0 0.0
    %586 = vmatpush1.msra.mxu0 0.0
    %587 = vmatprep.subr.mxu0 0.0
    %588 = vmatpush1.msra.mxu0 0.0
    %589 = vmatprep.subr.mxu0 0.0
    %590 = vmatpush1.msra.mxu0 0.0
    %591 = vmatprep.subr.mxu0 0.0
    %592 = vmatpush1.msra.mxu0 0.0
    %593 = vmatprep.subr.mxu0 0.0
    %594 = vmatpush1.msra.mxu0 0.0
    %595 = vmatprep.subr.mxu0 0.0
    %596 = vmatpush1.msra.mxu0 0.0
    %597 = vmatprep.subr.mxu0 0.0
    %598 = vmatpush1.msra.mxu0 0.0
    %599 = vmatprep.subr.mxu0 0.0
    %600 = vmatpush1.msra.mxu0 0.0
    %601 = vmatprep.subr.mxu0 0.0
    %602 = vmatpush1.msra.mxu0 0.0
    %603 = vmatprep.subr.mxu0 0.0
    %604 = vmatpush1.msra.mxu0 0.0
    %605 = vmatprep.subr.mxu0 0.0
    %606 = vmatpush1.msra.mxu0 0.0
    %607 = vmatprep.subr.mxu0 0.0
    %608 = vmatpush1.msra.mxu0 0.0
    %609 = vmatprep.subr.mxu0 0.0
    %610 = vmatpush1.msra.mxu0 0.0
    %611 = vmatprep.mubr.f32.mxu0 0.0
    %612 = vmatmul.mubr.f32.gmra.mrb[0].mxu0 %v542
    %v613 = vpop.f32.mrb[0].mxu0
    %v614 = vadd.f32 0.0, %v613
    %v615 = vpop.f32.mrb[0].mxu0
    %v616 = vadd.f32 0.0, %v615
    %617 = vmatprep.mubr.f32.mxu0 0.0
    %618 = vmatmul.mubr.f32.gmra.mrb[0].mxu0 %v545
    %v619 = vpop.f32.mrb[0].mxu0
    %v620 = vadd.f32 0.0, %v619
    %v621 = vpop.f32.mrb[0].mxu0
    %v622 = vadd.f32 0.0, %v621
    %623 = vdwg.mxu0
    %v624 = vld [vmem:[#allocation7] sm:$0xff]
    %v625 = vld [vmem:[#allocation7 + $0x8] sm:$0xff]
    %v626 = vfloor.f32 %v624
    %v627 = vfloor.f32 %v625
    %v628 = vsub.f32 %v624, %v626
    %v629 = vsub.f32 %v625, %v627
    %v630 = vsub.f32 1.0, %v628
    %v631 = vsub.f32 1.0, %v629
    %v632 = vcvt.f32.s32.to.zero.pseudo %v626
    %v633 = vcvt.f32.s32.to.zero.pseudo %v627
    %v634 = vld [vmem:[%s4] sm:$0xf]
    %v635 = vld [vmem:[%s5] sm:$0x3]
    %v637 = vlaneseq
    %v638 = vshrl.u32 %v637, 7
    %v639 = vsub.s32 0, %v638
    %v640 = vrot.slane %v635, %v639
    %v641 = vlaneseq
    %v642 = vshrl.u32 %v641, 7
    %v643 = vsub.s32 1, %v642
    %v644 = vrot.slane %v635, %v643
    %v645 = vcombine.low %v640, %v644
    %v647 = vunpack.c.l.s4 1983009808
    %v648 = vunpack.c.0.s8 %v647
    %v649 = vlaneseq
    %v650 = vshrl.u32 %v649, 7
    %v651 = vsub.s32 %v648, %v650
    %v652 = vrot.slane %v645, %v651
    %v654 = vmul.f32 %v634, %v652
    %vm655 = vcmp.eq.s32.totalorder %v632, 0
    %vm656 = vcmp.eq.s32.totalorder %v633, 0
    %v657 = vsel %vm655, %v630, 0.0
    %v658 = vsel %vm656, %v631, 0.0
    %vm659 = vcmp.eq.s32.totalorder %v632, 4294967295
    %vm660 = vcmp.eq.s32.totalorder %v633, 4294967295
    %v661 = vsel %vm659, %v628, 0.0
    %v662 = vsel %vm660, %v629, 0.0
    %v663 = vadd.f32 %v657, %v661
    %v664 = vadd.f32 %v658, %v662
    %v665 = vlaneseq
    %v666 = vshrl.u32 %v665, 7
    %v667 = vsub.s32 0, %v666
    %v668 = vrot.slane %v499, %v667
    %v669 = vlaneseq
    %v670 = vshrl.u32 %v669, 7
    %v671 = vsub.s32 0, %v670
    %v672 = vrot.slane %v501, %v671
    %v673 = vmul.f32 %v663, %v668
    %v674 = vmul.f32 %v664, %v672
    %v675 = vadd.f32 %v673, 0.0
    %v676 = vadd.f32 %v674, 0.0
    %v677 = vlaneseq
    %v678 = vshrl.u32 %v677, 7
    %v679 = vsub.s32 0, %v678
    %v680 = vrot.slane %v614, %v679
    %v681 = vlaneseq
    %v682 = vshrl.u32 %v681, 7
    %v683 = vsub.s32 0, %v682
    %v684 = vrot.slane %v616, %v683
    %v685 = vmul.f32 %v663, %v680
    %v686 = vmul.f32 %v664, %v684
    %v687 = vadd.f32 %v685, 0.0
    %v688 = vadd.f32 %v686, 0.0
    %vm689 = vcmp.eq.s32.totalorder %v632, 1
    %vm690 = vcmp.eq.s32.totalorder %v633, 1
    %v691 = vsel %vm689, %v630, 0.0
    %v692 = vsel %vm690, %v631, 0.0
    %v693 = vsel %vm655, %v628, 0.0
    %v694 = vsel %vm656, %v629, 0.0
    %v695 = vadd.f32 %v691, %v693
    %v696 = vadd.f32 %v692, %v694
    %v697 = vlaneseq
    %v698 = vshrl.u32 %v697, 7
    %v699 = vsub.s32 1, %v698
    %v700 = vrot.slane %v499, %v699
    %v701 = vlaneseq
    %v702 = vshrl.u32 %v701, 7
    %v703 = vsub.s32 1, %v702
    %v704 = vrot.slane %v501, %v703
    %v705 = vmul.f32 %v695, %v700
    %v706 = vmul.f32 %v696, %v704
    %v707 = vadd.f32 %v675, %v705
    %v708 = vadd.f32 %v676, %v706
    %v709 = vlaneseq
    %v710 = vshrl.u32 %v709, 7
    %v711 = vsub.s32 1, %v710
    %v712 = vrot.slane %v614, %v711
    %v713 = vlaneseq
    %v714 = vshrl.u32 %v713, 7
    %v715 = vsub.s32 1, %v714
    %v716 = vrot.slane %v616, %v715
    %v717 = vmul.f32 %v695, %v712
    %v718 = vmul.f32 %v696, %v716
    %v719 = vadd.f32 %v687, %v717
    %v720 = vadd.f32 %v688, %v718
    %vm721 = vcmp.eq.s32.totalorder %v632, 2
    %vm722 = vcmp.eq.s32.totalorder %v633, 2
    %v723 = vsel %vm721, %v630, 0.0
    %v724 = vsel %vm722, %v631, 0.0
    %v725 = vsel %vm689, %v628, 0.0
    %v726 = vsel %vm690, %v629, 0.0
    %v727 = vadd.f32 %v723, %v725
    %v728 = vadd.f32 %v724, %v726
    %v729 = vlaneseq
    %v730 = vshrl.u32 %v729, 7
    %v731 = vsub.s32 2, %v730
    %v732 = vrot.slane %v499, %v731
    %v733 = vlaneseq
    %v734 = vshrl.u32 %v733, 7
    %v735 = vsub.s32 2, %v734
    %v736 = vrot.slane %v501, %v735
    %v737 = vmul.f32 %v727, %v732
    %v738 = vmul.f32 %v728, %v736
    %v739 = vadd.f32 %v707, %v737
    %v740 = vadd.f32 %v708, %v738
    %v741 = vlaneseq
    %v742 = vshrl.u32 %v741, 7
    %v743 = vsub.s32 2, %v742
    %v744 = vrot.slane %v614, %v743
    %v745 = vlaneseq
    %v746 = vshrl.u32 %v745, 7
    %v747 = vsub.s32 2, %v746
    %v748 = vrot.slane %v616, %v747
    %v749 = vmul.f32 %v727, %v744
    %v750 = vmul.f32 %v728, %v748
    %v751 = vadd.f32 %v719, %v749
    %v752 = vadd.f32 %v720, %v750
    %vm753 = vcmp.eq.s32.totalorder %v632, 3
    %vm754 = vcmp.eq.s32.totalorder %v633, 3
    %v755 = vsel %vm753, %v630, 0.0
    %v756 = vsel %vm754, %v631, 0.0
    %v757 = vsel %vm721, %v628, 0.0
    %v758 = vsel %vm722, %v629, 0.0
    %v759 = vadd.f32 %v755, %v757
    %v760 = vadd.f32 %v756, %v758
    %v761 = vlaneseq
    %v762 = vshrl.u32 %v761, 7
    %v763 = vsub.s32 3, %v762
    %v764 = vrot.slane %v499, %v763
    %v765 = vlaneseq
    %v766 = vshrl.u32 %v765, 7
    %v767 = vsub.s32 3, %v766
    %v768 = vrot.slane %v501, %v767
    %v769 = vmul.f32 %v759, %v764
    %v770 = vmul.f32 %v760, %v768
    %v771 = vadd.f32 %v739, %v769
    %v772 = vadd.f32 %v740, %v770
    %v773 = vlaneseq
    %v774 = vshrl.u32 %v773, 7
    %v775 = vsub.s32 3, %v774
    %v776 = vrot.slane %v614, %v775
    %v777 = vlaneseq
    %v778 = vshrl.u32 %v777, 7
    %v779 = vsub.s32 3, %v778
    %v780 = vrot.slane %v616, %v779
    %v781 = vmul.f32 %v759, %v776
    %v782 = vmul.f32 %v760, %v780
    %v783 = vadd.f32 %v751, %v781
    %v784 = vadd.f32 %v752, %v782
    %vm785 = vcmp.eq.s32.totalorder %v632, 4
    %vm786 = vcmp.eq.s32.totalorder %v633, 4
    %v787 = vsel %vm785, %v630, 0.0
    %v788 = vsel %vm786, %v631, 0.0
    %v789 = vsel %vm753, %v628, 0.0
    %v790 = vsel %vm754, %v629, 0.0
    %v791 = vadd.f32 %v787, %v789
    %v792 = vadd.f32 %v788, %v790
    %v793 = vlaneseq
    %v794 = vshrl.u32 %v793, 7
    %v795 = vsub.s32 4, %v794
    %v796 = vrot.slane %v499, %v795
    %v797 = vlaneseq
    %v798 = vshrl.u32 %v797, 7
    %v799 = vsub.s32 4, %v798
    %v800 = vrot.slane %v501, %v799
    %v801 = vmul.f32 %v791, %v796
    %v802 = vmul.f32 %v792, %v800
    %v803 = vadd.f32 %v771, %v801
    %v804 = vadd.f32 %v772, %v802
    %v805 = vlaneseq
    %v806 = vshrl.u32 %v805, 7
    %v807 = vsub.s32 4, %v806
    %v808 = vrot.slane %v614, %v807
    %v809 = vlaneseq
    %v810 = vshrl.u32 %v809, 7
    %v811 = vsub.s32 4, %v810
    %v812 = vrot.slane %v616, %v811
    %v813 = vmul.f32 %v791, %v808
    %v814 = vmul.f32 %v792, %v812
    %v815 = vadd.f32 %v783, %v813
    %v816 = vadd.f32 %v784, %v814
    %vm817 = vcmp.eq.s32.totalorder %v632, 5
    %vm818 = vcmp.eq.s32.totalorder %v633, 5
    %v819 = vsel %vm817, %v630, 0.0
    %v820 = vsel %vm818, %v631, 0.0
    %v821 = vsel %vm785, %v628, 0.0
    %v822 = vsel %vm786, %v629, 0.0
    %v823 = vadd.f32 %v819, %v821
    %v824 = vadd.f32 %v820, %v822
    %v825 = vlaneseq
    %v826 = vshrl.u32 %v825, 7
    %v827 = vsub.s32 5, %v826
    %v828 = vrot.slane %v499, %v827
    %v829 = vlaneseq
    %v830 = vshrl.u32 %v829, 7
    %v831 = vsub.s32 5, %v830
    %v832 = vrot.slane %v501, %v831
    %v833 = vmul.f32 %v823, %v828
    %v834 = vmul.f32 %v824, %v832
    %v835 = vadd.f32 %v803, %v833
    %v836 = vadd.f32 %v804, %v834
    %v837 = vlaneseq
    %v838 = vshrl.u32 %v837, 7
    %v839 = vsub.s32 5, %v838
    %v840 = vrot.slane %v614, %v839
    %v841 = vlaneseq
    %v842 = vshrl.u32 %v841, 7
    %v843 = vsub.s32 5, %v842
    %v844 = vrot.slane %v616, %v843
    %v845 = vmul.f32 %v823, %v840
    %v846 = vmul.f32 %v824, %v844
    %v847 = vadd.f32 %v815, %v845
    %v848 = vadd.f32 %v816, %v846
    %vm849 = vcmp.eq.s32.totalorder %v632, 6
    %vm850 = vcmp.eq.s32.totalorder %v633, 6
    %v851 = vsel %vm849, %v630, 0.0
    %v852 = vsel %vm850, %v631, 0.0
    %v853 = vsel %vm817, %v628, 0.0
    %v854 = vsel %vm818, %v629, 0.0
    %v855 = vadd.f32 %v851, %v853
    %v856 = vadd.f32 %v852, %v854
    %v857 = vlaneseq
    %v858 = vshrl.u32 %v857, 7
    %v859 = vsub.s32 6, %v858
    %v860 = vrot.slane %v499, %v859
    %v861 = vlaneseq
    %v862 = vshrl.u32 %v861, 7
    %v863 = vsub.s32 6, %v862
    %v864 = vrot.slane %v501, %v863
    %v865 = vmul.f32 %v855, %v860
    %v866 = vmul.f32 %v856, %v864
    %v867 = vadd.f32 %v835, %v865
    %v868 = vadd.f32 %v836, %v866
    %v869 = vlaneseq
    %v870 = vshrl.u32 %v869, 7
    %v871 = vsub.s32 6, %v870
    %v872 = vrot.slane %v614, %v871
    %v873 = vlaneseq
    %v874 = vshrl.u32 %v873, 7
    %v875 = vsub.s32 6, %v874
    %v876 = vrot.slane %v616, %v875
    %v877 = vmul.f32 %v855, %v872
    %v878 = vmul.f32 %v856, %v876
    %v879 = vadd.f32 %v847, %v877
    %v880 = vadd.f32 %v848, %v878
    %vm881 = vcmp.eq.s32.totalorder %v632, 7
    %vm882 = vcmp.eq.s32.totalorder %v633, 7
    %v883 = vsel %vm881, %v630, 0.0
    %v884 = vsel %vm882, %v631, 0.0
    %v885 = vsel %vm849, %v628, 0.0
    %v886 = vsel %vm850, %v629, 0.0
    %v887 = vadd.f32 %v883, %v885
    %v888 = vadd.f32 %v884, %v886
    %v889 = vlaneseq
    %v890 = vshrl.u32 %v889, 7
    %v891 = vsub.s32 7, %v890
    %v892 = vrot.slane %v499, %v891
    %v893 = vlaneseq
    %v894 = vshrl.u32 %v893, 7
    %v895 = vsub.s32 7, %v894
    %v896 = vrot.slane %v501, %v895
    %v897 = vmul.f32 %v887, %v892
    %v898 = vmul.f32 %v888, %v896
    %v899 = vadd.f32 %v867, %v897
    %v900 = vadd.f32 %v868, %v898
    %v901 = vlaneseq
    %v902 = vshrl.u32 %v901, 7
    %v903 = vsub.s32 7, %v902
    %v904 = vrot.slane %v614, %v903
    %v905 = vlaneseq
    %v906 = vshrl.u32 %v905, 7
    %v907 = vsub.s32 7, %v906
    %v908 = vrot.slane %v616, %v907
    %v909 = vmul.f32 %v887, %v904
    %v910 = vmul.f32 %v888, %v908
    %v911 = vadd.f32 %v879, %v909
    %v912 = vadd.f32 %v880, %v910
    %vm913 = vcmp.eq.s32.totalorder %v632, 8
    %vm914 = vcmp.eq.s32.totalorder %v633, 8
    %v915 = vsel %vm913, %v630, 0.0
    %v916 = vsel %vm914, %v631, 0.0
    %v917 = vsel %vm881, %v628, 0.0
    %v918 = vsel %vm882, %v629, 0.0
    %v919 = vadd.f32 %v915, %v917
    %v920 = vadd.f32 %v916, %v918
    %v921 = vlaneseq
    %v922 = vshrl.u32 %v921, 7
    %v923 = vsub.s32 0, %v922
    %v924 = vrot.slane %v505, %v923
    %v925 = vlaneseq
    %v926 = vshrl.u32 %v925, 7
    %v927 = vsub.s32 0, %v926
    %v928 = vrot.slane %v507, %v927
    %v929 = vmul.f32 %v919, %v924
    %v930 = vmul.f32 %v920, %v928
    %v931 = vadd.f32 %v899, %v929
    %v932 = vadd.f32 %v900, %v930
    %v933 = vlaneseq
    %v934 = vshrl.u32 %v933, 7
    %v935 = vsub.s32 0, %v934
    %v936 = vrot.slane %v620, %v935
    %v937 = vlaneseq
    %v938 = vshrl.u32 %v937, 7
    %v939 = vsub.s32 0, %v938
    %v940 = vrot.slane %v622, %v939
    %v941 = vmul.f32 %v919, %v936
    %v942 = vmul.f32 %v920, %v940
    %v943 = vadd.f32 %v911, %v941
    %v944 = vadd.f32 %v912, %v942
    %vm945 = vcmp.eq.s32.totalorder %v632, 9
    %vm946 = vcmp.eq.s32.totalorder %v633, 9
    %v947 = vsel %vm945, %v630, 0.0
    %v948 = vsel %vm946, %v631, 0.0
    %v949 = vsel %vm913, %v628, 0.0
    %v950 = vsel %vm914, %v629, 0.0
    %v951 = vadd.f32 %v947, %v949
    %v952 = vadd.f32 %v948, %v950
    %v953 = vlaneseq
    %v954 = vshrl.u32 %v953, 7
    %v955 = vsub.s32 1, %v954
    %v956 = vrot.slane %v505, %v955
    %v957 = vlaneseq
    %v958 = vshrl.u32 %v957, 7
    %v959 = vsub.s32 1, %v958
    %v960 = vrot.slane %v507, %v959
    %v961 = vmul.f32 %v951, %v956
    %v962 = vmul.f32 %v952, %v960
    %v963 = vadd.f32 %v931, %v961
    %v964 = vadd.f32 %v932, %v962
    %v965 = vlaneseq
    %v966 = vshrl.u32 %v965, 7
    %v967 = vsub.s32 1, %v966
    %v968 = vrot.slane %v620, %v967
    %v969 = vlaneseq
    %v970 = vshrl.u32 %v969, 7
    %v971 = vsub.s32 1, %v970
    %v972 = vrot.slane %v622, %v971
    %v973 = vmul.f32 %v951, %v968
    %v974 = vmul.f32 %v952, %v972
    %v975 = vadd.f32 %v943, %v973
    %v976 = vadd.f32 %v944, %v974
    %vm977 = vcmp.eq.s32.totalorder %v632, 10
    %vm978 = vcmp.eq.s32.totalorder %v633, 10
    %v979 = vsel %vm977, %v630, 0.0
    %v980 = vsel %vm978, %v631, 0.0
    %v981 = vsel %vm945, %v628, 0.0
    %v982 = vsel %vm946, %v629, 0.0
    %v983 = vadd.f32 %v979, %v981
    %v984 = vadd.f32 %v980, %v982
    %v985 = vlaneseq
    %v986 = vshrl.u32 %v985, 7
    %v987 = vsub.s32 2, %v986
    %v988 = vrot.slane %v505, %v987
    %v989 = vlaneseq
    %v990 = vshrl.u32 %v989, 7
    %v991 = vsub.s32 2, %v990
    %v992 = vrot.slane %v507, %v991
    %v993 = vmul.f32 %v983, %v988
    %v994 = vmul.f32 %v984, %v992
    %v995 = vadd.f32 %v963, %v993
    %v996 = vadd.f32 %v964, %v994
    %v997 = vlaneseq
    %v998 = vshrl.u32 %v997, 7
    %v999 = vsub.s32 2, %v998
    %v1000 = vrot.slane %v620, %v999
    %v1001 = vlaneseq
    %v1002 = vshrl.u32 %v1001, 7
    %v1003 = vsub.s32 2, %v1002
    %v1004 = vrot.slane %v622, %v1003
    %v1005 = vmul.f32 %v983, %v1000
    %v1006 = vmul.f32 %v984, %v1004
    %v1007 = vadd.f32 %v975, %v1005
    %v1008 = vadd.f32 %v976, %v1006
    %v1010 = vlaneseq
    %v1011 = vshrl.u32 %v1010, 7
    %v1012 = vsub.s32 0, %v1011
    %v1013 = vrot.slane %v654, %v1012
    %v1014 = vlaneseq
    %v1015 = vshrl.u32 %v1014, 7
    %v1016 = vsub.s32 2, %v1015
    %v1017 = vrot.slane %v654, %v1016
    %v1020 = vlaneseq
    %v1021 = vshrl.u32 %v1020, 7
    %v1022 = vsub.s32 0, %v1021
    %v1023 = vrot.slane %v1013, %v1022
    %v1024 = vlaneseq
    %v1025 = vshrl.u32 %v1024, 7
    %v1026 = vsub.s32 0, %v1025
    %v1027 = vrot.slane %v1017, %v1026
    %v1028 = vmul.f32 %v995, %v1023
    %v1029 = vmul.f32 %v996, %v1027
    %v1030 = vlaneseq
    %v1031 = vshrl.u32 %v1030, 7
    %v1032 = vsub.s32 1, %v1031
    %v1033 = vrot.slane %v654, %v1032
    %v1034 = vlaneseq
    %v1035 = vshrl.u32 %v1034, 7
    %v1036 = vsub.s32 3, %v1035
    %v1037 = vrot.slane %v654, %v1036
    %v1040 = vlaneseq
    %v1041 = vshrl.u32 %v1040, 7
    %v1042 = vsub.s32 1, %v1041
    %v1043 = vrot.slane %v1033, %v1042
    %v1044 = vlaneseq
    %v1045 = vshrl.u32 %v1044, 7
    %v1046 = vsub.s32 1, %v1045
    %v1047 = vrot.slane %v1037, %v1046
    %v1048 = vmul.f32 %v1007, %v1043
    %v1049 = vmul.f32 %v1008, %v1047
    %v1050 = vld [vmem:[#allocation9] sm:$0xff]
    %v1051 = vld [vmem:[#allocation9 + $0x8] sm:$0xff]
    %v1052 = vld [vmem:[#allocation9 + $0x10] sm:$0xff]
    %v1053 = vld [vmem:[#allocation9 + $0x18] sm:$0xff]
    %v1054 = vld [vmem:[#allocation9 + $0x20] sm:$0xff]
    %v1055 = vld [vmem:[#allocation9 + $0x28] sm:$0xff]
    %v1056 = vld [vmem:[#allocation9 + $0x30] sm:$0xff]
    %v1057 = vld [vmem:[#allocation9 + $0x38] sm:$0xff]
    %v1058 = vld [vmem:[#allocation9 + $0x40] sm:$0xff]
    %v1059 = vld [vmem:[#allocation9 + $0x48] sm:$0xff]
    %v1060 = vld [vmem:[#allocation9 + $0x50] sm:$0xff]
    %v1061 = vld [vmem:[#allocation9 + $0x58] sm:$0xff]
    %v1062 = vld [vmem:[#allocation9 + $0x60] sm:$0xff]
    %v1063 = vld [vmem:[#allocation9 + $0x68] sm:$0xff]
    %v1064 = vld [vmem:[#allocation9 + $0x70] sm:$0xff]
    %v1065 = vld [vmem:[#allocation9 + $0x78] sm:$0xff]
    %v1066 = vld [vmem:[#allocation9 + $0x80] sm:$0xff]
    %v1067 = vld [vmem:[#allocation9 + $0x88] sm:$0xff]
    %v1068 = vld [vmem:[#allocation9 + $0x90] sm:$0xff]
    %v1069 = vld [vmem:[#allocation9 + $0x98] sm:$0xff]
    %v1070 = vld [vmem:[#allocation9 + $0xa0] sm:$0xff]
    %v1071 = vld [vmem:[#allocation9 + $0xa8] sm:$0xff]
    %v1072 = vld [vmem:[#allocation9 + $0xb0] sm:$0xff]
    %v1073 = vld [vmem:[#allocation9 + $0xb8] sm:$0xff]
    %v1074 = vld [vmem:[#allocation10] sm:$0xff]
    %v1075 = vld [vmem:[#allocation10 + $0x8] sm:$0xff]
    %v1076 = vld [vmem:[#allocation10 + $0x10] sm:$0xff]
    %v1077 = vld [vmem:[#allocation10 + $0x18] sm:$0xff]
    %v1078 = vld [vmem:[#allocation10 + $0x20] sm:$0xff]
    %v1079 = vld [vmem:[#allocation10 + $0x28] sm:$0xff]
    %v1080 = vld [vmem:[#allocation10 + $0x30] sm:$0xff]
    %v1081 = vld [vmem:[#allocation10 + $0x38] sm:$0xff]
    %v1082 = vld [vmem:[#allocation10 + $0x40] sm:$0xff]
    %v1083 = vld [vmem:[#allocation10 + $0x48] sm:$0xff]
    %v1084 = vld [vmem:[#allocation10 + $0x50] sm:$0xff]
    %v1085 = vld [vmem:[#allocation10 + $0x58] sm:$0xff]
    %v1086 = vld [vmem:[#allocation10 + $0x60] sm:$0xff]
    %v1087 = vld [vmem:[#allocation10 + $0x68] sm:$0xff]
    %v1088 = vld [vmem:[#allocation10 + $0x70] sm:$0xff]
    %v1089 = vld [vmem:[#allocation10 + $0x78] sm:$0xff]
    %v1090 = vld [vmem:[#allocation10 + $0x80] sm:$0xff]
    %v1091 = vld [vmem:[#allocation10 + $0x88] sm:$0xff]
    %v1092 = vld [vmem:[#allocation10 + $0x90] sm:$0xff]
    %v1093 = vld [vmem:[#allocation10 + $0x98] sm:$0xff]
    %v1094 = vld [vmem:[#allocation10 + $0xa0] sm:$0xff]
    %v1095 = vld [vmem:[#allocation10 + $0xa8] sm:$0xff]
    %v1096 = vld [vmem:[#allocation10 + $0xb0] sm:$0xff]
    %v1097 = vld [vmem:[#allocation10 + $0xb8] sm:$0xff]
    %vm1098 = vcmask 523264
    %v1100 = vsel %vm1098, %v1049, 0
    %1102 = vmatprep.subr.mxu0 0.0
    %1103 = vmatpush1.msra.mxu0 %v1074
    %1104 = vmatprep.subr.mxu0 0.0
    %1105 = vmatpush1.msra.mxu0 %v1075
    %1106 = vmatprep.subr.mxu0 0.0
    %1107 = vmatpush1.msra.mxu0 %v1076
    %1108 = vmatprep.subr.mxu0 0.0
    %1109 = vmatpush1.msra.mxu0 %v1077
    %1110 = vmatprep.subr.mxu0 0.0
    %1111 = vmatpush1.msra.mxu0 %v1078
    %1112 = vmatprep.subr.mxu0 0.0
    %1113 = vmatpush1.msra.mxu0 %v1079
    %1114 = vmatprep.subr.mxu0 0.0
    %1115 = vmatpush1.msra.mxu0 %v1080
    %1116 = vmatprep.subr.mxu0 0.0
    %1117 = vmatpush1.msra.mxu0 %v1081
    %1118 = vmatprep.subr.mxu0 0.0
    %1119 = vmatpush1.msra.mxu0 %v1082
    %1120 = vmatprep.subr.mxu0 0.0
    %1121 = vmatpush1.msra.mxu0 %v1083
    %1122 = vmatprep.subr.mxu0 0.0
    %1123 = vmatpush1.msra.mxu0 %v1084
    %1124 = vmatprep.subr.mxu0 0.0
    %1125 = vmatpush1.msra.mxu0 %v1085
    %1126 = vmatprep.subr.mxu0 0.0
    %1127 = vmatpush1.msra.mxu0 %v1086
    %1128 = vmatprep.subr.mxu0 0.0
    %1129 = vmatpush1.msra.mxu0 %v1087
    %1130 = vmatprep.subr.mxu0 0.0
    %1131 = vmatpush1.msra.mxu0 %v1088
    %1132 = vmatprep.subr.mxu0 0.0
    %1133 = vmatpush1.msra.mxu0 %v1089
    %1134 = vmatprep.subr.mxu0 0.0
    %1135 = vmatpush1.msra.mxu0 %v1090
    %1136 = vmatprep.subr.mxu0 0.0
    %1137 = vmatpush1.msra.mxu0 %v1091
    %1138 = vmatprep.subr.mxu0 0.0
    %1139 = vmatpush1.msra.mxu0 %v1092
    %1140 = vmatprep.subr.mxu0 0.0
    %1141 = vmatpush1.msra.mxu0 %v1093
    %1142 = vmatprep.subr.mxu0 0.0
    %1143 = vmatpush1.msra.mxu0 %v1094
    %1144 = vmatprep.subr.mxu0 0.0
    %1145 = vmatpush1.msra.mxu0 %v1095
    %1146 = vmatprep.subr.mxu0 0.0
    %1147 = vmatpush1.msra.mxu0 %v1096
    %1148 = vmatprep.subr.mxu0 0.0
    %1149 = vmatpush1.msra.mxu0 %v1097
    %1150 = vmatprep.subr.mxu0 0.0
    %1151 = vmatpush1.msra.mxu0 0.0
    %1152 = vmatprep.subr.mxu0 0.0
    %1153 = vmatpush1.msra.mxu0 0.0
    %1154 = vmatprep.subr.mxu0 0.0
    %1155 = vmatpush1.msra.mxu0 0.0
    %1156 = vmatprep.subr.mxu0 0.0
    %1157 = vmatpush1.msra.mxu0 0.0
    %1158 = vmatprep.subr.mxu0 0.0
    %1159 = vmatpush1.msra.mxu0 0.0
    %1160 = vmatprep.subr.mxu0 0.0
    %1161 = vmatpush1.msra.mxu0 0.0
    %1162 = vmatprep.subr.mxu0 0.0
    %1163 = vmatpush1.msra.mxu0 0.0
    %1164 = vmatprep.subr.mxu0 0.0
    %1165 = vmatpush1.msra.mxu0 0.0
    %1166 = vmatprep.mubr.f32.mxu0 %v1100
    %1167 = vmatmul.mubr.f32.gmra.mrb[0].mxu0 %v1048
    %v1168 = vpop.f32.mrb[0].mxu0
    %v1169 = vadd.f32 0.0, %v1168
    %v1170 = vpop.f32.mrb[0].mxu0
    %1171 = vdwg.mxu0
    %v1173 = vsel %vm1098, %v1029, 0
    %1175 = vmatprep.subr.mxu0 0.0
    %1176 = vmatpush1.msra.mxu0 %v1050
    %1177 = vmatprep.subr.mxu0 0.0
    %1178 = vmatpush1.msra.mxu0 %v1051
    %1179 = vmatprep.subr.mxu0 0.0
    %1180 = vmatpush1.msra.mxu0 %v1052
    %1181 = vmatprep.subr.mxu0 0.0
    %1182 = vmatpush1.msra.mxu0 %v1053
    %1183 = vmatprep.subr.mxu0 0.0
    %1184 = vmatpush1.msra.mxu0 %v1054
    %1185 = vmatprep.subr.mxu0 0.0
    %1186 = vmatpush1.msra.mxu0 %v1055
    %1187 = vmatprep.subr.mxu0 0.0
    %1188 = vmatpush1.msra.mxu0 %v1056
    %1189 = vmatprep.subr.mxu0 0.0
    %1190 = vmatpush1.msra.mxu0 %v1057
    %1191 = vmatprep.subr.mxu0 0.0
    %1192 = vmatpush1.msra.mxu0 %v1058
    %1193 = vmatprep.subr.mxu0 0.0
    %1194 = vmatpush1.msra.mxu0 %v1059
    %1195 = vmatprep.subr.mxu0 0.0
    %1196 = vmatpush1.msra.mxu0 %v1060
    %1197 = vmatprep.subr.mxu0 0.0
    %1198 = vmatpush1.msra.mxu0 %v1061
    %1199 = vmatprep.subr.mxu0 0.0
    %1200 = vmatpush1.msra.mxu0 %v1062
    %1201 = vmatprep.subr.mxu0 0.0
    %1202 = vmatpush1.msra.mxu0 %v1063
    %1203 = vmatprep.subr.mxu0 0.0
    %1204 = vmatpush1.msra.mxu0 %v1064
    %1205 = vmatprep.subr.mxu0 0.0
    %1206 = vmatpush1.msra.mxu0 %v1065
    %1207 = vmatprep.subr.mxu0 0.0
    %1208 = vmatpush1.msra.mxu0 %v1066
    %1209 = vmatprep.subr.mxu0 0.0
    %1210 = vmatpush1.msra.mxu0 %v1067
    %1211 = vmatprep.subr.mxu0 0.0
    %1212 = vmatpush1.msra.mxu0 %v1068
    %1213 = vmatprep.subr.mxu0 0.0
    %1214 = vmatpush1.msra.mxu0 %v1069
    %1215 = vmatprep.subr.mxu0 0.0
    %1216 = vmatpush1.msra.mxu0 %v1070
    %1217 = vmatprep.subr.mxu0 0.0
    %1218 = vmatpush1.msra.mxu0 %v1071
    %1219 = vmatprep.subr.mxu0 0.0
    %1220 = vmatpush1.msra.mxu0 %v1072
    %1221 = vmatprep.subr.mxu0 0.0
    %1222 = vmatpush1.msra.mxu0 %v1073
    %1223 = vmatprep.subr.mxu0 0.0
    %1224 = vmatpush1.msra.mxu0 0.0
    %1225 = vmatprep.subr.mxu0 0.0
    %1226 = vmatpush1.msra.mxu0 0.0
    %1227 = vmatprep.subr.mxu0 0.0
    %1228 = vmatpush1.msra.mxu0 0.0
    %1229 = vmatprep.subr.mxu0 0.0
    %1230 = vmatpush1.msra.mxu0 0.0
    %1231 = vmatprep.subr.mxu0 0.0
    %1232 = vmatpush1.msra.mxu0 0.0
    %1233 = vmatprep.subr.mxu0 0.0
    %1234 = vmatpush1.msra.mxu0 0.0
    %1235 = vmatprep.subr.mxu0 0.0
    %1236 = vmatpush1.msra.mxu0 0.0
    %1237 = vmatprep.subr.mxu0 0.0
    %1238 = vmatpush1.msra.mxu0 0.0
    %1239 = vmatprep.mubr.f32.mxu0 %v1173
    %1240 = vmatmul.mubr.f32.gmra.mrb[0].mxu0 %v1028
    %v1241 = vpop.f32.mrb[0].mxu0
    %v1242 = vadd.f32 %v1169, %v1241
    %v1243 = vpop.f32.mrb[0].mxu0
    %1244 = vdwg.mxu0
    %1245 = vst [vmem:[#allocation12] sm:$0xff] %v1242
    // Predicated region
    $region54: #{tpu_custom_call.1} parent=1 // pred_check
      _
    $region55: #{tpu_custom_call.1} parent=1 // pred_check_branch
      %1247 = sbr.rel (0) target = $region57
    $region56: #{tpu_custom_call.1} parent=1 // pred_region
      %s1249 = ssub.s32 128, 128
      %1250 = vsyncadd [#allocation4], %s1249
      %s1252 = sshll.u32 [#allocation12], 4
      %s1253 = int_to_ptr.vmem [resolvable:$true] %s1252
      %1255 = dma.vmem_to_hbm [thread:$0]  %s1253, 128, %s8, [#allocation4]
    $region57: #{tpu_custom_call.1} parent=1 // pred_fallthru
      _
    // Predicated region
    $region58: #{tpu_custom_call.1} parent=1 // pred_check
      _
    $region59: #{tpu_custom_call.1} parent=1 // pred_check_branch
      %1257 = sbr.rel (0) target = $region61
    $region60: #{tpu_custom_call.1} parent=1 // pred_region
      %1258 = dma.done [#allocation4], 128
    $region61: #{tpu_custom_call.1} parent=1 // pred_fallthru
      _
    %1259 = vsyncpa [#allocation3], 1
    %1260 = vsyncpa [#allocation8], 1
    %1261 = vsyncpa [#allocation11], 1
    %1262 = vsyncpa [#allocation4], 1
    %1263 = vsyncpa [#allocation5], 1

</llo_original>
